<compile_context>
chip_gen: v7x
topology: tpu7x:2x2x1
jax: 0.10.0
libtpu: 0.0.40
codegen_flags: <defaults>
</compile_context>

<pallas_src>
import math

import jax
import jax.numpy as jnp
import numpy as np
from jax.experimental import pallas as pl
from jax.experimental.pallas import tpu as pltpu

# ---- BertConfig-like hyper-parameters (small) ----
HIDDEN = 32            # config.hidden_size
NHEAD = 4              # config.num_attention_heads
HEAD_DIM = HIDDEN // NHEAD
DIM_FF = 64            # config.dim_feedforward
CTX_DIM = 32           # ctx_dim (defaults to hidden_size)
LN_EPS = 1e-12         # config.layer_norm_eps
BATCH = 2
SEQ_Q = 8              # query sequence length
SEQ_K = 8              # context sequence length (== SEQ_Q so rows stack evenly)


def _layer_norm(x, gamma, beta):
    mu = jnp.mean(x, axis=-1, keepdims=True)
    var = jnp.mean(jnp.square(x - mu), axis=-1, keepdims=True)
    return (x - mu) * jax.lax.rsqrt(var + LN_EPS) * gamma + beta


def bert_xattn_kernel(xc_ref, w_proj_ref, w_ffn_ref, pvec_ref, out_ref):
    """Single invocation: the whole (~45 KB) problem lives in VMEM.

    xc_ref     : (B*Sq + B*Sk, 32)  rows 0:16 = x, rows 16:32 = ctx
    w_proj_ref : (32, 96)           [wq_t*scale | wk_t | wv_t]
    w_ffn_ref  : (96, 64)           rows 0:32 = w1_t, rows 32:96 lanes 0:32 = w2_t
    pvec_ref   : (8, 96)            one param vector per sublane row
    out_ref    : (16, 64)           lanes 0:32 = attention_output,
                                    lanes 32:64 = scores as (B*Sq, H*Sk)
    """
    NQ = BATCH * SEQ_Q
    dh = HEAD_DIM

    xc = xc_ref[...]                                      # (32, 32)

    # ---- fused Q/K/V projection: one MXU op; scale already folded into Q cols.
    # Bias row is added everywhere; the mismatched row/lane regions are never read.
    qkv = (jnp.dot(xc, w_proj_ref[...], preferred_element_type=jnp.float32)
           + pvec_ref[0:1, :])                            # (32, 96)
    qkv4 = qkv.reshape(2 * BATCH, SEQ_Q, 3 * HIDDEN)      # [x b0, x b1, ctx b0, ctx b1]

    # ---- stack heads head-major along the LEADING batch dim -> (B*H, S, dh),
    # so the whole attention is 2 batched dot_generals instead of 8 tiny ones.
    q_bh = jnp.concatenate(
        [qkv4[0:BATCH, :, h * dh:(h + 1) * dh] for h in range(NHEAD)], axis=0)
    k_bh = jnp.concatenate(
        [qkv4[BATCH:2 * BATCH, :, HIDDEN + h * dh:HIDDEN + (h + 1) * dh]
         for h in range(NHEAD)], axis=0)
    v_bh = jnp.concatenate(
        [qkv4[BATCH:2 * BATCH, :, 2 * HIDDEN + h * dh:2 * HIDDEN + (h + 1) * dh]
         for h in range(NHEAD)], axis=0)                  # each (B*H, S, dh) = (8, 8, 8)

    s = jnp.einsum('nqd,nkd->nqk', q_bh, k_bh,
                   preferred_element_type=jnp.float32)    # (B*H, Sq, Sk), pre-softmax scores
    # TODO(synk): additive ctx_att_mask would be applied to `s` here.
    p = jnp.exp(s - jnp.max(s, axis=-1, keepdims=True))
    p = p / jnp.sum(p, axis=-1, keepdims=True)            # stable softmax (f32)
    o = jnp.einsum('nqk,nkd->nqd', p, v_bh,
                   preferred_element_type=jnp.float32)    # (B*H, Sq, dh)

    # ---- re-assemble lane-dense slabs (single lane concat each, no out-proj).
    attn = jnp.concatenate(
        [o[h * BATCH:(h + 1) * BATCH] for h in range(NHEAD)],
        axis=-1).reshape(NQ, HIDDEN)                      # (16, 32), lane = h*dh + d
    scores_flat = jnp.concatenate(
        [s[h * BATCH:(h + 1) * BATCH] for h in range(NHEAD)],
        axis=-1).reshape(NQ, NHEAD * SEQ_K)               # (16, 32), lane = h*Sk + k

    # ---- BertSelfOutput (dropouts identity in eval) ----
    x = xc[0:NQ, :]                                       # residual input
    g1 = pvec_ref[3:4, 0:HIDDEN]
    be1 = pvec_ref[4:5, 0:HIDDEN]
    g2 = pvec_ref[5:6, 0:HIDDEN]
    be2 = pvec_ref[6:7, 0:HIDDEN]

    s1 = _layer_norm(attn + x, g1, be1)                                       # LayerNorm
    hid = jnp.maximum(
        jnp.dot(s1, w_ffn_ref[0:HIDDEN, :], preferred_element_type=jnp.float32)
        + pvec_ref[1:2, 0:DIM_FF], 0.0)                                       # dense + relu
    ff = (jnp.dot(hid, w_ffn_ref[HIDDEN:HIDDEN + DIM_FF, 0:HIDDEN],
                  preferred_element_type=jnp.float32)
          + pvec_ref[2:3, 0:HIDDEN])                                          # dense2
    out = _layer_norm(ff + s1, g2, be2)                                       # LayerNorm2

    # single lane-dense store: [attention_output | scores]
    out_ref[...] = jnp.concatenate([out, scores_flat], axis=-1).astype(out_ref.dtype)


@jax.jit
def bert_x_attention(x, ctx, prepped):
    """x: (B, Sq, hidden), ctx: (B, Sk, ctx_dim).
    Returns (attention_output (B,Sq,hidden), attention_scores (B,H,Sq,Sk))."""
    B, Sq, D = x.shape
    _, Sk, Dc = ctx.shape
    # Stack query rows on top of context rows -> one input DMA. (Sq == Sk, D == Dc here.)
    xc = jnp.concatenate([x.reshape(B * Sq, D), ctx.reshape(B * Sk, Dc)], axis=0)

    cost = pl.CostEstimate(flops=344_064, transcendentals=544, bytes_accessed=48_128)
    vmem = pl.BlockSpec(memory_space=pltpu.MemorySpace.VMEM)
    slab = pl.pallas_call(
        bert_xattn_kernel,
        out_shape=jax.ShapeDtypeStruct((B * Sq, D + NHEAD * Sk), jnp.float32),
        in_specs=[vmem] * 4,
        out_specs=vmem,
        cost_estimate=cost,
    )(xc, prepped['w_proj'], prepped['w_ffn'], prepped['pvec'])

    out = slab[:, :D].reshape(B, Sq, D)
    # scores were written lane-dense as (B*Sq, H*Sk); unpack on the host side.
    scores = slab[:, D:].reshape(B, Sq, NHEAD, Sk).transpose(0, 2, 1, 3)
    return out, scores


def prepare_params(p):
    """Host-side one-time prep: transpose, fuse, scale-fold, and pack params into 3 slabs."""
    scale = 1.0 / math.sqrt(HEAD_DIM)
    f32 = jnp.float32

    # (32, 96) = [wq_t * scale | wk_t | wv_t]
    w_proj = jnp.concatenate([(p['wq'] * scale).T, p['wk'].T, p['wv'].T], axis=1).astype(f32)

    # (96, 64): rows 0:32 = w1_t (32,64); rows 32:96 lanes 0:32 = w2_t (64,32), rest zero.
    w2_pad = jnp.pad(p['w2'].T, ((0, 0), (0, DIM_FF - HIDDEN)))
    w_ffn = jnp.concatenate([p['w1'].T, w2_pad], axis=0).astype(f32)

    def row(v):
        return jnp.pad(v, (0, 3 * HIDDEN - v.shape[0]))[None, :]

    pvec = jnp.concatenate([
        row(jnp.concatenate([p['bq'] * scale, p['bk'], p['bv']])),   # row 0: fused proj bias
        row(p['b1']),                                                # row 1
        row(p['b2']),                                                # row 2
        row(p['g1']),                                                # row 3
        row(p['be1']),                                               # row 4
        row(p['g2']),                                                # row 5
        row(p['be2']),                                               # row 6
        jnp.zeros((1, 3 * HIDDEN), f32),                             # row 7: pad
    ], axis=0).astype(f32)                                           # (8, 96)

    return {'w_proj': w_proj, 'w_ffn': w_ffn, 'pvec': pvec}


def reference_forward(x, ctx, p):
    """Pure-JAX mirror of BertXAttention.forward (wights=False, mask=None)."""
    B, Sq, D = x.shape
    _, Sk, _ = ctx.shape
    q = x @ p['wq'].T + p['bq']
    k = ctx @ p['wk'].T + p['bk']
    v = ctx @ p['wv'].T + p['bv']

    def split(t, S):
        return t.reshape(B, S, NHEAD, HEAD_DIM).transpose(0, 2, 1, 3)

    qh, kh, vh = split(q, Sq), split(k, Sk), split(v, Sk)
    scores = jnp.einsum('bhqd,bhkd->bhqk', qh, kh) / math.sqrt(HEAD_DIM)
    probs = jax.nn.softmax(scores, axis=-1)
    ctxl = jnp.einsum('bhqk,bhkd->bhqd', probs, vh)
    attn = ctxl.transpose(0, 2, 1, 3).reshape(B, Sq, D)

    def ln(t, g, b_):
        mu = t.mean(-1, keepdims=True)
        var = ((t - mu) ** 2).mean(-1, keepdims=True)
        return (t - mu) / jnp.sqrt(var + LN_EPS) * g + b_

    s1 = ln(attn + x, p['g1'], p['be1'])
    ffn = jnp.maximum(s1 @ p['w1'].T + p['b1'], 0.0) @ p['w2'].T + p['b2']
    out = ln(ffn + s1, p['g2'], p['be2'])
    return out, scores


def init_params(key):
    ks = jax.random.split(key, 14)
    f32 = jnp.float32
    n = lambda k, shape, s: s * jax.random.normal(k, shape, f32)
    return {
        # nn.Linear weights in PyTorch (out, in) convention
        'wq': n(ks[0], (HIDDEN, HIDDEN), 0.05),  'bq': n(ks[1], (HIDDEN,), 0.02),
        'wk': n(ks[2], (HIDDEN, CTX_DIM), 0.05), 'bk': n(ks[3], (HIDDEN,), 0.02),
        'wv': n(ks[4], (HIDDEN, CTX_DIM), 0.05), 'bv': n(ks[5], (HIDDEN,), 0.02),
        'w1': n(ks[6], (DIM_FF, HIDDEN), 0.05),  'b1': n(ks[7], (DIM_FF,), 0.02),
        'w2': n(ks[8], (HIDDEN, DIM_FF), 0.05),  'b2': n(ks[9], (HIDDEN,), 0.02),
        # LayerNorm params (randomized to exercise the affine path)
        'g1': 1.0 + n(ks[10], (HIDDEN,), 0.1),   'be1': n(ks[11], (HIDDEN,), 0.05),
        'g2': 1.0 + n(ks[12], (HIDDEN,), 0.1),   'be2': n(ks[13], (HIDDEN,), 0.05),
    }


if __name__ == "__main__":
    key = jax.random.PRNGKey(0)
    kp, kx, kc = jax.random.split(key, 3)
    params = init_params(kp)
    prepped = prepare_params(params)

    # input_tensor (queries) and ctx_tensor (keys/values), batch-major like PyTorch BERT
    x = jax.random.normal(kx, (BATCH, SEQ_Q, HIDDEN), jnp.float32)
    ctx = jax.random.normal(kc, (BATCH, SEQ_K, CTX_DIM), jnp.float32)

    out, scores = bert_x_attention(x, ctx, prepped)
    out, scores = jax.block_until_ready((out, scores))

    ref_out, ref_scores = jax.block_until_ready(reference_forward(x, ctx, params))
    assert out.shape == (BATCH, SEQ_Q, HIDDEN)
    assert scores.shape == (BATCH, NHEAD, SEQ_Q, SEQ_K)
    np.testing.assert_allclose(np.asarray(out), np.asarray(ref_out),
                               rtol=2e-3, atol=2e-3)
    np.testing.assert_allclose(np.asarray(scores), np.asarray(ref_scores),
                               rtol=2e-3, atol=2e-3)
    print("KERNEL_OK")
</pallas_src>

<mosaic_0001>
module attributes {stable_mosaic.version = 11 : i64} {
  func.func @bert_xattn_kernel(%arg0: memref<32x32xf32, #tpu.memory_space<vmem>>, %arg1: memref<32x96xf32, #tpu.memory_space<vmem>>, %arg2: memref<96x64xf32, #tpu.memory_space<vmem>>, %arg3: memref<8x96xf32, #tpu.memory_space<vmem>>, %arg4: memref<16x64xf32, #tpu.memory_space<vmem>>) attributes {dimension_semantics = [], scalar_prefetch = 0 : i64, scratch_operands = 0 : i64, tpu.core_type = #tpu.core_type<tc>} {
    %c0 = arith.constant 0 : index
    %c0_0 = arith.constant 0 : index
    %0 = vector.load %arg0[%c0, %c0_0] : memref<32x32xf32, #tpu.memory_space<vmem>>, vector<32x32xf32>
    %c0_1 = arith.constant 0 : index
    %c0_2 = arith.constant 0 : index
    %1 = vector.load %arg1[%c0_1, %c0_2] : memref<32x96xf32, #tpu.memory_space<vmem>>, vector<32x96xf32>
    %cst = arith.constant dense<0.000000e+00> : vector<32x96xf32>
    %2 = tpu.matmul %0, %1, %cst {dimension_numbers = #tpu.dot_dimension_numbers<[1], [0], [0], [1], [0, 0, 1, 1], [], []>} : vector<32x32xf32>, vector<32x96xf32>, vector<32x96xf32> -> vector<32x96xf32>
    %c0_3 = arith.constant 0 : index
    %c0_4 = arith.constant 0 : index
    %3 = vector.load %arg3[%c0_3, %c0_4] : memref<8x96xf32, #tpu.memory_space<vmem>>, vector<1x96xf32>
    %4 = vector.broadcast %3 : vector<1x96xf32> to vector<32x96xf32>
    %5 = arith.addf %2, %4 : vector<32x96xf32>
    %6 = vector.shape_cast %5 : vector<32x96xf32> to vector<4x8x96xf32>
    %7 = vector.extract_strided_slice %6 {offsets = [0, 0, 0], sizes = [2, 8, 8], strides = [1, 1, 1]} : vector<4x8x96xf32> to vector<2x8x8xf32>
    %8 = vector.extract_strided_slice %6 {offsets = [0, 0, 8], sizes = [2, 8, 8], strides = [1, 1, 1]} : vector<4x8x96xf32> to vector<2x8x8xf32>
    %9 = vector.extract_strided_slice %6 {offsets = [0, 0, 16], sizes = [2, 8, 8], strides = [1, 1, 1]} : vector<4x8x96xf32> to vector<2x8x8xf32>
    %10 = vector.extract_strided_slice %6 {offsets = [0, 0, 24], sizes = [2, 8, 8], strides = [1, 1, 1]} : vector<4x8x96xf32> to vector<2x8x8xf32>
    %11 = tpu.concatenate %7, %8, %9, %10 in 0 : vector<2x8x8xf32>, vector<2x8x8xf32>, vector<2x8x8xf32>, vector<2x8x8xf32> -> vector<8x8x8xf32>
    %12 = vector.extract_strided_slice %6 {offsets = [2, 0, 32], sizes = [2, 8, 8], strides = [1, 1, 1]} : vector<4x8x96xf32> to vector<2x8x8xf32>
    %13 = vector.extract_strided_slice %6 {offsets = [2, 0, 40], sizes = [2, 8, 8], strides = [1, 1, 1]} : vector<4x8x96xf32> to vector<2x8x8xf32>
    %14 = vector.extract_strided_slice %6 {offsets = [2, 0, 48], sizes = [2, 8, 8], strides = [1, 1, 1]} : vector<4x8x96xf32> to vector<2x8x8xf32>
    %15 = vector.extract_strided_slice %6 {offsets = [2, 0, 56], sizes = [2, 8, 8], strides = [1, 1, 1]} : vector<4x8x96xf32> to vector<2x8x8xf32>
    %16 = tpu.concatenate %12, %13, %14, %15 in 0 : vector<2x8x8xf32>, vector<2x8x8xf32>, vector<2x8x8xf32>, vector<2x8x8xf32> -> vector<8x8x8xf32>
    %17 = vector.extract_strided_slice %6 {offsets = [2, 0, 64], sizes = [2, 8, 8], strides = [1, 1, 1]} : vector<4x8x96xf32> to vector<2x8x8xf32>
    %18 = vector.extract_strided_slice %6 {offsets = [2, 0, 72], sizes = [2, 8, 8], strides = [1, 1, 1]} : vector<4x8x96xf32> to vector<2x8x8xf32>
    %19 = vector.extract_strided_slice %6 {offsets = [2, 0, 80], sizes = [2, 8, 8], strides = [1, 1, 1]} : vector<4x8x96xf32> to vector<2x8x8xf32>
    %20 = vector.extract_strided_slice %6 {offsets = [2, 0, 88], sizes = [2, 8, 8], strides = [1, 1, 1]} : vector<4x8x96xf32> to vector<2x8x8xf32>
    %21 = tpu.concatenate %17, %18, %19, %20 in 0 : vector<2x8x8xf32>, vector<2x8x8xf32>, vector<2x8x8xf32>, vector<2x8x8xf32> -> vector<8x8x8xf32>
    "tpu.trace_start"() <{level = 10 : i32, message = "nqd,nkd->nqk"}> : () -> ()
    %cst_5 = arith.constant dense<0.000000e+00> : vector<8x8x8xf32>
    %22 = tpu.matmul %11, %16, %cst_5 {dimension_numbers = #tpu.dot_dimension_numbers<[2], [2], [1], [1], [0, 0, 0, 1, 1, 1], [0], [0]>} : vector<8x8x8xf32>, vector<8x8x8xf32>, vector<8x8x8xf32> -> vector<8x8x8xf32>
    "tpu.trace_stop"() : () -> ()
    %cst_6 = arith.constant dense<0xFF800000> : vector<8x8xf32>
    %23 = vector.multi_reduction <maximumf>, %22, %cst_6 [2] : vector<8x8x8xf32> to vector<8x8xf32>
    %24 = vector.shape_cast %23 : vector<8x8xf32> to vector<8x8x1xf32>
    %25 = vector.broadcast %24 : vector<8x8x1xf32> to vector<8x8x8xf32>
    %26 = arith.subf %22, %25 : vector<8x8x8xf32>
    %27 = math.exp %26 : vector<8x8x8xf32>
    %cst_7 = arith.constant dense<0.000000e+00> : vector<8x8xf32>
    %28 = vector.multi_reduction <add>, %27, %cst_7 [2] : vector<8x8x8xf32> to vector<8x8xf32>
    %29 = vector.shape_cast %28 : vector<8x8xf32> to vector<8x8x1xf32>
    %30 = vector.broadcast %29 : vector<8x8x1xf32> to vector<8x8x8xf32>
    %31 = arith.divf %27, %30 : vector<8x8x8xf32>
    "tpu.trace_start"() <{level = 10 : i32, message = "nqk,nkd->nqd"}> : () -> ()
    %cst_8 = arith.constant dense<0.000000e+00> : vector<8x8x8xf32>
    %32 = tpu.matmul %31, %21, %cst_8 {dimension_numbers = #tpu.dot_dimension_numbers<[2], [1], [1], [2], [0, 0, 0, 1, 1, 2], [0], [0]>} : vector<8x8x8xf32>, vector<8x8x8xf32>, vector<8x8x8xf32> -> vector<8x8x8xf32>
    "tpu.trace_stop"() : () -> ()
    %33 = vector.extract_strided_slice %32 {offsets = [0, 0, 0], sizes = [2, 8, 8], strides = [1, 1, 1]} : vector<8x8x8xf32> to vector<2x8x8xf32>
    %34 = vector.extract_strided_slice %32 {offsets = [2, 0, 0], sizes = [2, 8, 8], strides = [1, 1, 1]} : vector<8x8x8xf32> to vector<2x8x8xf32>
    %35 = vector.extract_strided_slice %32 {offsets = [4, 0, 0], sizes = [2, 8, 8], strides = [1, 1, 1]} : vector<8x8x8xf32> to vector<2x8x8xf32>
    %36 = vector.extract_strided_slice %32 {offsets = [6, 0, 0], sizes = [2, 8, 8], strides = [1, 1, 1]} : vector<8x8x8xf32> to vector<2x8x8xf32>
    %37 = tpu.concatenate %33, %34, %35, %36 in 2 : vector<2x8x8xf32>, vector<2x8x8xf32>, vector<2x8x8xf32>, vector<2x8x8xf32> -> vector<2x8x32xf32>
    %38 = vector.shape_cast %37 : vector<2x8x32xf32> to vector<16x32xf32>
    %39 = vector.extract_strided_slice %22 {offsets = [0, 0, 0], sizes = [2, 8, 8], strides = [1, 1, 1]} : vector<8x8x8xf32> to vector<2x8x8xf32>
    %40 = vector.extract_strided_slice %22 {offsets = [2, 0, 0], sizes = [2, 8, 8], strides = [1, 1, 1]} : vector<8x8x8xf32> to vector<2x8x8xf32>
    %41 = vector.extract_strided_slice %22 {offsets = [4, 0, 0], sizes = [2, 8, 8], strides = [1, 1, 1]} : vector<8x8x8xf32> to vector<2x8x8xf32>
    %42 = vector.extract_strided_slice %22 {offsets = [6, 0, 0], sizes = [2, 8, 8], strides = [1, 1, 1]} : vector<8x8x8xf32> to vector<2x8x8xf32>
    %43 = tpu.concatenate %39, %40, %41, %42 in 2 : vector<2x8x8xf32>, vector<2x8x8xf32>, vector<2x8x8xf32>, vector<2x8x8xf32> -> vector<2x8x32xf32>
    %44 = vector.shape_cast %43 : vector<2x8x32xf32> to vector<16x32xf32>
    %45 = vector.extract_strided_slice %0 {offsets = [0, 0], sizes = [16, 32], strides = [1, 1]} : vector<32x32xf32> to vector<16x32xf32>
    %c3 = arith.constant 3 : index
    %c0_9 = arith.constant 0 : index
    %46 = vector.load %arg3[%c3, %c0_9] : memref<8x96xf32, #tpu.memory_space<vmem>>, vector<1x32xf32>
    %c4 = arith.constant 4 : index
    %c0_10 = arith.constant 0 : index
    %47 = vector.load %arg3[%c4, %c0_10] : memref<8x96xf32, #tpu.memory_space<vmem>>, vector<1x32xf32>
    %c5 = arith.constant 5 : index
    %c0_11 = arith.constant 0 : index
    %48 = vector.load %arg3[%c5, %c0_11] : memref<8x96xf32, #tpu.memory_space<vmem>>, vector<1x32xf32>
    %c6 = arith.constant 6 : index
    %c0_12 = arith.constant 0 : index
    %49 = vector.load %arg3[%c6, %c0_12] : memref<8x96xf32, #tpu.memory_space<vmem>>, vector<1x32xf32>
    %50 = arith.addf %38, %45 : vector<16x32xf32>
    %cst_13 = arith.constant dense<0.000000e+00> : vector<16xf32>
    %51 = vector.multi_reduction <add>, %50, %cst_13 [1] : vector<16x32xf32> to vector<16xf32>
    %52 = vector.shape_cast %51 : vector<16xf32> to vector<16x1xf32>
    %cst_14 = arith.constant 3.200000e+01 : f32
    %53 = vector.broadcast %cst_14 : f32 to vector<16x1xf32>
    %54 = arith.divf %52, %53 : vector<16x1xf32>
    %55 = vector.broadcast %54 : vector<16x1xf32> to vector<16x32xf32>
    %56 = arith.subf %50, %55 : vector<16x32xf32>
    %57 = arith.mulf %56, %56 : vector<16x32xf32>
    %cst_15 = arith.constant dense<0.000000e+00> : vector<16xf32>
    %58 = vector.multi_reduction <add>, %57, %cst_15 [1] : vector<16x32xf32> to vector<16xf32>
    %59 = vector.shape_cast %58 : vector<16xf32> to vector<16x1xf32>
    %cst_16 = arith.constant 3.200000e+01 : f32
    %60 = vector.broadcast %cst_16 : f32 to vector<16x1xf32>
    %61 = arith.divf %59, %60 : vector<16x1xf32>
    %62 = vector.broadcast %54 : vector<16x1xf32> to vector<16x32xf32>
    %63 = arith.subf %50, %62 : vector<16x32xf32>
    %cst_17 = arith.constant 9.99999996E-13 : f32
    %64 = vector.broadcast %cst_17 : f32 to vector<16x1xf32>
    %65 = arith.addf %61, %64 : vector<16x1xf32>
    %66 = math.rsqrt %65 : vector<16x1xf32>
    %67 = vector.broadcast %66 : vector<16x1xf32> to vector<16x32xf32>
    %68 = arith.mulf %63, %67 : vector<16x32xf32>
    %69 = vector.broadcast %46 : vector<1x32xf32> to vector<16x32xf32>
    %70 = arith.mulf %68, %69 : vector<16x32xf32>
    %71 = vector.broadcast %47 : vector<1x32xf32> to vector<16x32xf32>
    %72 = arith.addf %70, %71 : vector<16x32xf32>
    %c0_18 = arith.constant 0 : index
    %c0_19 = arith.constant 0 : index
    %73 = vector.load %arg2[%c0_18, %c0_19] : memref<96x64xf32, #tpu.memory_space<vmem>>, vector<32x64xf32>
    %cst_20 = arith.constant dense<0.000000e+00> : vector<16x64xf32>
    %74 = tpu.matmul %72, %73, %cst_20 {dimension_numbers = #tpu.dot_dimension_numbers<[1], [0], [0], [1], [0, 0, 1, 1], [], []>} : vector<16x32xf32>, vector<32x64xf32>, vector<16x64xf32> -> vector<16x64xf32>
    %c1 = arith.constant 1 : index
    %c0_21 = arith.constant 0 : index
    %75 = vector.load %arg3[%c1, %c0_21] : memref<8x96xf32, #tpu.memory_space<vmem>>, vector<1x64xf32>
    %76 = vector.broadcast %75 : vector<1x64xf32> to vector<16x64xf32>
    %77 = arith.addf %74, %76 : vector<16x64xf32>
    %cst_22 = arith.constant 0.000000e+00 : f32
    %78 = vector.broadcast %cst_22 : f32 to vector<16x64xf32>
    %79 = arith.maximumf %77, %78 : vector<16x64xf32>
    %c32 = arith.constant 32 : index
    %c0_23 = arith.constant 0 : index
    %80 = vector.load %arg2[%c32, %c0_23] : memref<96x64xf32, #tpu.memory_space<vmem>>, vector<64x32xf32>
    %cst_24 = arith.constant dense<0.000000e+00> : vector<16x32xf32>
    %81 = tpu.matmul %79, %80, %cst_24 {dimension_numbers = #tpu.dot_dimension_numbers<[1], [0], [0], [1], [0, 0, 1, 1], [], []>} : vector<16x64xf32>, vector<64x32xf32>, vector<16x32xf32> -> vector<16x32xf32>
    %c2 = arith.constant 2 : index
    %c0_25 = arith.constant 0 : index
    %82 = vector.load %arg3[%c2, %c0_25] : memref<8x96xf32, #tpu.memory_space<vmem>>, vector<1x32xf32>
    %83 = vector.broadcast %82 : vector<1x32xf32> to vector<16x32xf32>
    %84 = arith.addf %81, %83 : vector<16x32xf32>
    %85 = arith.addf %84, %72 : vector<16x32xf32>
    %cst_26 = arith.constant dense<0.000000e+00> : vector<16xf32>
    %86 = vector.multi_reduction <add>, %85, %cst_26 [1] : vector<16x32xf32> to vector<16xf32>
    %87 = vector.shape_cast %86 : vector<16xf32> to vector<16x1xf32>
    %cst_27 = arith.constant 3.200000e+01 : f32
    %88 = vector.broadcast %cst_27 : f32 to vector<16x1xf32>
    %89 = arith.divf %87, %88 : vector<16x1xf32>
    %90 = vector.broadcast %89 : vector<16x1xf32> to vector<16x32xf32>
    %91 = arith.subf %85, %90 : vector<16x32xf32>
    %92 = arith.mulf %91, %91 : vector<16x32xf32>
    %cst_28 = arith.constant dense<0.000000e+00> : vector<16xf32>
    %93 = vector.multi_reduction <add>, %92, %cst_28 [1] : vector<16x32xf32> to vector<16xf32>
    %94 = vector.shape_cast %93 : vector<16xf32> to vector<16x1xf32>
    %cst_29 = arith.constant 3.200000e+01 : f32
    %95 = vector.broadcast %cst_29 : f32 to vector<16x1xf32>
    %96 = arith.divf %94, %95 : vector<16x1xf32>
    %97 = vector.broadcast %89 : vector<16x1xf32> to vector<16x32xf32>
    %98 = arith.subf %85, %97 : vector<16x32xf32>
    %cst_30 = arith.constant 9.99999996E-13 : f32
    %99 = vector.broadcast %cst_30 : f32 to vector<16x1xf32>
    %100 = arith.addf %96, %99 : vector<16x1xf32>
    %101 = math.rsqrt %100 : vector<16x1xf32>
    %102 = vector.broadcast %101 : vector<16x1xf32> to vector<16x32xf32>
    %103 = arith.mulf %98, %102 : vector<16x32xf32>
    %104 = vector.broadcast %48 : vector<1x32xf32> to vector<16x32xf32>
    %105 = arith.mulf %103, %104 : vector<16x32xf32>
    %106 = vector.broadcast %49 : vector<1x32xf32> to vector<16x32xf32>
    %107 = arith.addf %105, %106 : vector<16x32xf32>
    %108 = tpu.concatenate %107, %44 in 1 : vector<16x32xf32>, vector<16x32xf32> -> vector<16x64xf32>
    %c0_31 = arith.constant 0 : index
    %c0_32 = arith.constant 0 : index
    %109 = vector.load %arg4[%c0_31, %c0_32] : memref<16x64xf32, #tpu.memory_space<vmem>>, vector<16x64xf32>
    tpu.vector_store %arg4[%c0_31, %c0_32], %108 {strides = array<i32>} : memref<16x64xf32, #tpu.memory_space<vmem>>, vector<16x64xf32>,
    return
  }
}

</mosaic_0001>

<llo_original>
// kernel: bert_x_attention.1
$region0: #{bert_x_attention.1}
  #allocation0 [shape = 'u32[]', space=smem, size = 0x4, offset = 0x4, fixed_abs, tag = 'smem constant byte address 0x4 - core index']
  #allocation1 [shape = 'u32[144,128]{1,0:T(1,128)}', space=vmem, size = 0x12000, scoped, tag = 'internal scratch']
  %s0 = inlined_call_operand.vmem [shape: f32[32,32], index: 0, kind: input, shape index: {}]
  %s1 = inlined_call_operand.vmem [shape: f32[32,96], index: 1, kind: input, shape index: {}]
  %s2 = inlined_call_operand.vmem [shape: f32[96,64], index: 2, kind: input, shape index: {}]
  %s3 = inlined_call_operand.vmem [shape: f32[8,96], index: 3, kind: input, shape index: {}]
  %s4 = inlined_call_operand.vmem [shape: f32[16,64], index: 4, kind: output, shape index: {}]
  %s5 = sld [smem:[#allocation0]]
  $region26: #{bert_x_attention.1} parent=0
    _
  %s7 = ssub.s32 1, %s5
  %s8 = scalar_select 0, %s7, %s5
  // Predicated region
  $region2: #{bert_x_attention.1} parent=0 // pred_check
    _
  $region3: #{bert_x_attention.1} parent=0 // pred_check_branch
    %10 = sbr.rel (0) target = $region5
  $region4: #{bert_x_attention.1} parent=0 // pred_region
    _
  $region5: #{bert_x_attention.1} parent=0 // pred_fallthru
    _
  // Predicated region
  $region6: #{bert_x_attention.1} parent=0 // pred_check
    _
  $region7: #{bert_x_attention.1} parent=0 // pred_check_branch
    %12 = sbr.rel (0) target = $region9
  $region8: #{bert_x_attention.1} parent=0 // pred_region
    _
  $region9: #{bert_x_attention.1} parent=0 // pred_fallthru
    _
  // Predicated region
  $region10: #{bert_x_attention.1} parent=0 // pred_check
    _
  $region11: #{bert_x_attention.1} parent=0 // pred_check_branch
    %14 = sbr.rel (0) target = $region13
  $region12: #{bert_x_attention.1} parent=0 // pred_region
    _
  $region13: #{bert_x_attention.1} parent=0 // pred_fallthru
    _
  // Predicated region
  $region14: #{bert_x_attention.1} parent=0 // pred_check
    _
  $region15: #{bert_x_attention.1} parent=0 // pred_check_branch
    %16 = sbr.rel (0) target = $region17
  $region16: #{bert_x_attention.1} parent=0 // pred_region
    _
  $region17: #{bert_x_attention.1} parent=0 // pred_fallthru
    _
  %v17 = vld [vmem:[%s0] sm:$0xff]
  %v18 = vld [vmem:[%s0 + $0x8] sm:$0xff]
  %v19 = vld [vmem:[%s0 + $0x10] sm:$0xff]
  %v20 = vld [vmem:[%s0 + $0x18] sm:$0xff]
  %v21 = vld [vmem:[%s1] sm:$0xff]
  %v22 = vld [vmem:[%s1 + $0x8] sm:$0xff]
  %v23 = vld [vmem:[%s1 + $0x10] sm:$0xff]
  %v24 = vld [vmem:[%s1 + $0x18] sm:$0xff]
  %v25 = vld [vmem:[%s3] sm:$0x1]
  %v26 = vlaneseq
  %v27 = vshrl.u32 %v26, 7
  %v28 = vsub.s32 0, %v27
  %v29 = vrot.slane %v25, %v28
  %vm30 = vcmask 261120
  %v32 = vsel %vm30, %v17, 0
  %v35 = vsel %vm30, %v18, 0
  %v38 = vsel %vm30, %v19, 0
  %v41 = vsel %vm30, %v20, 0
  %43 = vmatprep.subr.mxu0 0.0
  %44 = vmatpush1.msra.mxu0 %v21
  %45 = vmatprep.subr.mxu0 0.0
  %46 = vmatpush1.msra.mxu0 %v22
  %47 = vmatprep.subr.mxu0 0.0
  %48 = vmatpush1.msra.mxu0 %v23
  %49 = vmatprep.subr.mxu0 0.0
  %50 = vmatpush1.msra.mxu0 %v24
  %51 = vmatprep.subr.mxu0 0.0
  %52 = vmatpush1.msra.mxu0 0.0
  %53 = vmatprep.subr.mxu0 0.0
  %54 = vmatpush1.msra.mxu0 0.0
  %55 = vmatprep.subr.mxu0 0.0
  %56 = vmatpush1.msra.mxu0 0.0
  %57 = vmatprep.subr.mxu0 0.0
  %58 = vmatpush1.msra.mxu0 0.0
  %59 = vmatprep.subr.mxu0 0.0
  %60 = vmatpush1.msra.mxu0 0.0
  %61 = vmatprep.subr.mxu0 0.0
  %62 = vmatpush1.msra.mxu0 0.0
  %63 = vmatprep.subr.mxu0 0.0
  %64 = vmatpush1.msra.mxu0 0.0
  %65 = vmatprep.subr.mxu0 0.0
  %66 = vmatpush1.msra.mxu0 0.0
  %67 = vmatprep.subr.mxu0 0.0
  %68 = vmatpush1.msra.mxu0 0.0
  %69 = vmatprep.subr.mxu0 0.0
  %70 = vmatpush1.msra.mxu0 0.0
  %71 = vmatprep.subr.mxu0 0.0
  %72 = vmatpush1.msra.mxu0 0.0
  %73 = vmatprep.subr.mxu0 0.0
  %74 = vmatpush1.msra.mxu0 0.0
  %75 = vmatprep.subr.mxu0 0.0
  %76 = vmatpush1.msra.mxu0 0.0
  %77 = vmatprep.subr.mxu0 0.0
  %78 = vmatpush1.msra.mxu0 0.0
  %79 = vmatprep.subr.mxu0 0.0
  %80 = vmatpush1.msra.mxu0 0.0
  %81 = vmatprep.subr.mxu0 0.0
  %82 = vmatpush1.msra.mxu0 0.0
  %83 = vmatprep.subr.mxu0 0.0
  %84 = vmatpush1.msra.mxu0 0.0
  %85 = vmatprep.subr.mxu0 0.0
  %86 = vmatpush1.msra.mxu0 0.0
  %87 = vmatprep.subr.mxu0 0.0
  %88 = vmatpush1.msra.mxu0 0.0
  %89 = vmatprep.subr.mxu0 0.0
  %90 = vmatpush1.msra.mxu0 0.0
  %91 = vmatprep.subr.mxu0 0.0
  %92 = vmatpush1.msra.mxu0 0.0
  %93 = vmatprep.subr.mxu0 0.0
  %94 = vmatpush1.msra.mxu0 0.0
  %95 = vmatprep.subr.mxu0 0.0
  %96 = vmatpush1.msra.mxu0 0.0
  %97 = vmatprep.subr.mxu0 0.0
  %98 = vmatpush1.msra.mxu0 0.0
  %99 = vmatprep.subr.mxu0 0.0
  %100 = vmatpush1.msra.mxu0 0.0
  %101 = vmatprep.subr.mxu0 0.0
  %102 = vmatpush1.msra.mxu0 0.0
  %103 = vmatprep.subr.mxu0 0.0
  %104 = vmatpush1.msra.mxu0 0.0
  %105 = vmatprep.subr.mxu0 0.0
  %106 = vmatpush1.msra.mxu0 0.0
  %107 = vmatprep.mubr.f32.mxu0 0.0
  %108 = vmatmul.mubr.f32.gmra.mrb[0].mxu0 %v32
  %v109 = vpop.f32.mrb[0].mxu0
  %v110 = vadd.f32 %v29, %v109
  %v111 = vpop.f32.mrb[0].mxu0
  %112 = vmatprep.mubr.f32.mxu0 0.0
  %113 = vmatmul.mubr.f32.gmra.mrb[0].mxu0 %v35
  %v114 = vpop.f32.mrb[0].mxu0
  %v115 = vadd.f32 %v29, %v114
  %v116 = vpop.f32.mrb[0].mxu0
  %117 = vmatprep.mubr.f32.mxu0 0.0
  %118 = vmatmul.mubr.f32.gmra.mrb[0].mxu0 %v38
  %v119 = vpop.f32.mrb[0].mxu0
  %v120 = vadd.f32 %v29, %v119
  %v121 = vpop.f32.mrb[0].mxu0
  %122 = vmatprep.mubr.f32.mxu0 0.0
  %123 = vmatmul.mubr.f32.gmra.mrb[0].mxu0 %v41
  %v124 = vpop.f32.mrb[0].mxu0
  %v125 = vadd.f32 %v29, %v124
  %v126 = vpop.f32.mrb[0].mxu0
  %127 = vdwg.mxu0
  %130 = vrot.lane.b32.xlu0 %v110, 120
  %v131 = vpop.permute.xlu0 %130
  %132 = vrot.lane.b32.xlu0 %v115, 120
  %v133 = vpop.permute.xlu0 %132
  %134 = vrot.lane.b32.xlu0 %v110, 112
  %v135 = vpop.permute.xlu0 %134
  %136 = vrot.lane.b32.xlu0 %v115, 112
  %v137 = vpop.permute.xlu0 %136
  %138 = vrot.lane.b32.xlu0 %v110, 104
  %v139 = vpop.permute.xlu0 %138
  %140 = vrot.lane.b32.xlu0 %v115, 104
  %v141 = vpop.permute.xlu0 %140
  %144 = vrot.lane.b32.xlu0 %v120, 120
  %v145 = vpop.permute.xlu0 %144
  %146 = vrot.lane.b32.xlu0 %v125, 120
  %v147 = vpop.permute.xlu0 %146
  %148 = vrot.lane.b32.xlu0 %v120, 112
  %v149 = vpop.permute.xlu0 %148
  %150 = vrot.lane.b32.xlu0 %v125, 112
  %v151 = vpop.permute.xlu0 %150
  %152 = vrot.lane.b32.xlu0 %v120, 104
  %v153 = vpop.permute.xlu0 %152
  %154 = vrot.lane.b32.xlu0 %v125, 104
  %v155 = vpop.permute.xlu0 %154
  %156 = vrot.lane.b32.xlu0 %v120, 96
  %v157 = vpop.permute.xlu0 %156
  %vm158 = vcmask 64512
  %v159 = vsel %vm158, %v110, 0
  %v161 = vsel %vm158, %v157, 0
  %163 = vmatprep.subr.mxu0 0.0
  %164 = vmatpush1.xpose.msra.mxu0 %v161
  %165 = vmatprep.subr.mxu0 0.0
  %166 = vmatpush1.xpose.msra.mxu0 0.0
  %167 = vmatprep.subr.mxu0 0.0
  %168 = vmatpush1.xpose.msra.mxu0 0.0
  %169 = vmatprep.subr.mxu0 0.0
  %170 = vmatpush1.xpose.msra.mxu0 0.0
  %171 = vmatprep.subr.mxu0 0.0
  %172 = vmatpush1.xpose.msra.mxu0 0.0
  %173 = vmatprep.subr.mxu0 0.0
  %174 = vmatpush1.xpose.msra.mxu0 0.0
  %175 = vmatprep.subr.mxu0 0.0
  %176 = vmatpush1.xpose.msra.mxu0 0.0
  %177 = vmatprep.subr.mxu0 0.0
  %178 = vmatpush1.xpose.msra.mxu0 0.0
  %179 = vmatprep.subr.mxu0 0.0
  %180 = vmatpush1.xpose.msra.mxu0 0.0
  %181 = vmatprep.subr.mxu0 0.0
  %182 = vmatpush1.xpose.msra.mxu0 0.0
  %183 = vmatprep.subr.mxu0 0.0
  %184 = vmatpush1.xpose.msra.mxu0 0.0
  %185 = vmatprep.subr.mxu0 0.0
  %186 = vmatpush1.xpose.msra.mxu0 0.0
  %187 = vmatprep.subr.mxu0 0.0
  %188 = vmatpush1.xpose.msra.mxu0 0.0
  %189 = vmatprep.subr.mxu0 0.0
  %190 = vmatpush1.xpose.msra.mxu0 0.0
  %191 = vmatprep.subr.mxu0 0.0
  %192 = vmatpush1.xpose.msra.mxu0 0.0
  %193 = vmatprep.subr.mxu0 0.0
  %194 = vmatpush1.xpose.msra.mxu0 0.0
  %195 = vmatprep.subr.mxu0 0.0
  %196 = vmatpush1.xpose.msra.mxu0 0.0
  %197 = vmatprep.subr.mxu0 0.0
  %198 = vmatpush1.xpose.msra.mxu0 0.0
  %199 = vmatprep.subr.mxu0 0.0
  %200 = vmatpush1.xpose.msra.mxu0 0.0
  %201 = vmatprep.subr.mxu0 0.0
  %202 = vmatpush1.xpose.msra.mxu0 0.0
  %203 = vmatprep.subr.mxu0 0.0
  %204 = vmatpush1.xpose.msra.mxu0 0.0
  %205 = vmatprep.subr.mxu0 0.0
  %206 = vmatpush1.xpose.msra.mxu0 0.0
  %207 = vmatprep.subr.mxu0 0.0
  %208 = vmatpush1.xpose.msra.mxu0 0.0
  %209 = vmatprep.subr.mxu0 0.0
  %210 = vmatpush1.xpose.msra.mxu0 0.0
  %211 = vmatprep.subr.mxu0 0.0
  %212 = vmatpush1.xpose.msra.mxu0 0.0
  %213 = vmatprep.subr.mxu0 0.0
  %214 = vmatpush1.xpose.msra.mxu0 0.0
  %215 = vmatprep.subr.mxu0 0.0
  %216 = vmatpush1.xpose.msra.mxu0 0.0
  %217 = vmatprep.subr.mxu0 0.0
  %218 = vmatpush1.xpose.msra.mxu0 0.0
  %219 = vmatprep.subr.mxu0 0.0
  %220 = vmatpush1.xpose.msra.mxu0 0.0
  %221 = vmatprep.subr.mxu0 0.0
  %222 = vmatpush1.xpose.msra.mxu0 0.0
  %223 = vmatprep.subr.mxu0 0.0
  %224 = vmatpush1.xpose.msra.mxu0 0.0
  %225 = vmatprep.subr.mxu0 0.0
  %226 = vmatpush1.xpose.msra.mxu0 0.0
  %227 = vmatprep.mubr.f32.mxu0 0.0
  %228 = vmatmul.mubr.f32.gmra.mrb[0].mxu0 %v159
  %v229 = vpop.f32.mrb[0].mxu0
  %v230 = vadd.f32 0.0, %v229
  %v231 = vpop.f32.mrb[0].mxu0
  %232 = vdwg.mxu0
  %233 = vrot.lane.b32.xlu0 %v125, 96
  %v234 = vpop.permute.xlu0 %233
  %v235 = vsel %vm158, %v115, 0
  %v237 = vsel %vm158, %v234, 0
  %239 = vmatprep.subr.mxu0 0.0
  %240 = vmatpush1.xpose.msra.mxu0 %v237
  %241 = vmatprep.subr.mxu0 0.0
  %242 = vmatpush1.xpose.msra.mxu0 0.0
  %243 = vmatprep.subr.mxu0 0.0
  %244 = vmatpush1.xpose.msra.mxu0 0.0
  %245 = vmatprep.subr.mxu0 0.0
  %246 = vmatpush1.xpose.msra.mxu0 0.0
  %247 = vmatprep.subr.mxu0 0.0
  %248 = vmatpush1.xpose.msra.mxu0 0.0
  %249 = vmatprep.subr.mxu0 0.0
  %250 = vmatpush1.xpose.msra.mxu0 0.0
  %251 = vmatprep.subr.mxu0 0.0
  %252 = vmatpush1.xpose.msra.mxu0 0.0
  %253 = vmatprep.subr.mxu0 0.0
  %254 = vmatpush1.xpose.msra.mxu0 0.0
  %255 = vmatprep.subr.mxu0 0.0
  %256 = vmatpush1.xpose.msra.mxu0 0.0
  %257 = vmatprep.subr.mxu0 0.0
  %258 = vmatpush1.xpose.msra.mxu0 0.0
  %259 = vmatprep.subr.mxu0 0.0
  %260 = vmatpush1.xpose.msra.mxu0 0.0
  %261 = vmatprep.subr.mxu0 0.0
  %262 = vmatpush1.xpose.msra.mxu0 0.0
  %263 = vmatprep.subr.mxu0 0.0
  %264 = vmatpush1.xpose.msra.mxu0 0.0
  %265 = vmatprep.subr.mxu0 0.0
  %266 = vmatpush1.xpose.msra.mxu0 0.0
  %267 = vmatprep.subr.mxu0 0.0
  %268 = vmatpush1.xpose.msra.mxu0 0.0
  %269 = vmatprep.subr.mxu0 0.0
  %270 = vmatpush1.xpose.msra.mxu0 0.0
  %271 = vmatprep.subr.mxu0 0.0
  %272 = vmatpush1.xpose.msra.mxu0 0.0
  %273 = vmatprep.subr.mxu0 0.0
  %274 = vmatpush1.xpose.msra.mxu0 0.0
  %275 = vmatprep.subr.mxu0 0.0
  %276 = vmatpush1.xpose.msra.mxu0 0.0
  %277 = vmatprep.subr.mxu0 0.0
  %278 = vmatpush1.xpose.msra.mxu0 0.0
  %279 = vmatprep.subr.mxu0 0.0
  %280 = vmatpush1.xpose.msra.mxu0 0.0
  %281 = vmatprep.subr.mxu0 0.0
  %282 = vmatpush1.xpose.msra.mxu0 0.0
  %283 = vmatprep.subr.mxu0 0.0
  %284 = vmatpush1.xpose.msra.mxu0 0.0
  %285 = vmatprep.subr.mxu0 0.0
  %286 = vmatpush1.xpose.msra.mxu0 0.0
  %287 = vmatprep.subr.mxu0 0.0
  %288 = vmatpush1.xpose.msra.mxu0 0.0
  %289 = vmatprep.subr.mxu0 0.0
  %290 = vmatpush1.xpose.msra.mxu0 0.0
  %291 = vmatprep.subr.mxu0 0.0
  %292 = vmatpush1.xpose.msra.mxu0 0.0
  %293 = vmatprep.subr.mxu0 0.0
  %294 = vmatpush1.xpose.msra.mxu0 0.0
  %295 = vmatprep.subr.mxu0 0.0
  %296 = vmatpush1.xpose.msra.mxu0 0.0
  %297 = vmatprep.subr.mxu0 0.0
  %298 = vmatpush1.xpose.msra.mxu0 0.0
  %299 = vmatprep.subr.mxu0 0.0
  %300 = vmatpush1.xpose.msra.mxu0 0.0
  %301 = vmatprep.subr.mxu0 0.0
  %302 = vmatpush1.xpose.msra.mxu0 0.0
  %303 = vmatprep.mubr.f32.mxu0 0.0
  %304 = vmatmul.mubr.f32.gmra.mrb[0].mxu0 %v235
  %v305 = vpop.f32.mrb[0].mxu0
  %v306 = vadd.f32 0.0, %v305
  %v307 = vpop.f32.mrb[0].mxu0
  %308 = vdwg.mxu0
  %309 = vrot.lane.b32.xlu0 %v145, 96
  %v310 = vpop.permute.xlu0 %309
  %v311 = vsel %vm158, %v131, 0
  %v313 = vsel %vm158, %v310, 0
  %315 = vmatprep.subr.mxu0 0.0
  %316 = vmatpush1.xpose.msra.mxu0 %v313
  %317 = vmatprep.subr.mxu0 0.0
  %318 = vmatpush1.xpose.msra.mxu0 0.0
  %319 = vmatprep.subr.mxu0 0.0
  %320 = vmatpush1.xpose.msra.mxu0 0.0
  %321 = vmatprep.subr.mxu0 0.0
  %322 = vmatpush1.xpose.msra.mxu0 0.0
  %323 = vmatprep.subr.mxu0 0.0
  %324 = vmatpush1.xpose.msra.mxu0 0.0
  %325 = vmatprep.subr.mxu0 0.0
  %326 = vmatpush1.xpose.msra.mxu0 0.0
  %327 = vmatprep.subr.mxu0 0.0
  %328 = vmatpush1.xpose.msra.mxu0 0.0
  %329 = vmatprep.subr.mxu0 0.0
  %330 = vmatpush1.xpose.msra.mxu0 0.0
  %331 = vmatprep.subr.mxu0 0.0
  %332 = vmatpush1.xpose.msra.mxu0 0.0
  %333 = vmatprep.subr.mxu0 0.0
  %334 = vmatpush1.xpose.msra.mxu0 0.0
  %335 = vmatprep.subr.mxu0 0.0
  %336 = vmatpush1.xpose.msra.mxu0 0.0
  %337 = vmatprep.subr.mxu0 0.0
  %338 = vmatpush1.xpose.msra.mxu0 0.0
  %339 = vmatprep.subr.mxu0 0.0
  %340 = vmatpush1.xpose.msra.mxu0 0.0
  %341 = vmatprep.subr.mxu0 0.0
  %342 = vmatpush1.xpose.msra.mxu0 0.0
  %343 = vmatprep.subr.mxu0 0.0
  %344 = vmatpush1.xpose.msra.mxu0 0.0
  %345 = vmatprep.subr.mxu0 0.0
  %346 = vmatpush1.xpose.msra.mxu0 0.0
  %347 = vmatprep.subr.mxu0 0.0
  %348 = vmatpush1.xpose.msra.mxu0 0.0
  %349 = vmatprep.subr.mxu0 0.0
  %350 = vmatpush1.xpose.msra.mxu0 0.0
  %351 = vmatprep.subr.mxu0 0.0
  %352 = vmatpush1.xpose.msra.mxu0 0.0
  %353 = vmatprep.subr.mxu0 0.0
  %354 = vmatpush1.xpose.msra.mxu0 0.0
  %355 = vmatprep.subr.mxu0 0.0
  %356 = vmatpush1.xpose.msra.mxu0 0.0
  %357 = vmatprep.subr.mxu0 0.0
  %358 = vmatpush1.xpose.msra.mxu0 0.0
  %359 = vmatprep.subr.mxu0 0.0
  %360 = vmatpush1.xpose.msra.mxu0 0.0
  %361 = vmatprep.subr.mxu0 0.0
  %362 = vmatpush1.xpose.msra.mxu0 0.0
  %363 = vmatprep.subr.mxu0 0.0
  %364 = vmatpush1.xpose.msra.mxu0 0.0
  %365 = vmatprep.subr.mxu0 0.0
  %366 = vmatpush1.xpose.msra.mxu0 0.0
  %367 = vmatprep.subr.mxu0 0.0
  %368 = vmatpush1.xpose.msra.mxu0 0.0
  %369 = vmatprep.subr.mxu0 0.0
  %370 = vmatpush1.xpose.msra.mxu0 0.0
  %371 = vmatprep.subr.mxu0 0.0
  %372 = vmatpush1.xpose.msra.mxu0 0.0
  %373 = vmatprep.subr.mxu0 0.0
  %374 = vmatpush1.xpose.msra.mxu0 0.0
  %375 = vmatprep.subr.mxu0 0.0
  %376 = vmatpush1.xpose.msra.mxu0 0.0
  %377 = vmatprep.subr.mxu0 0.0
  %378 = vmatpush1.xpose.msra.mxu0 0.0
  %379 = vmatprep.mubr.f32.mxu0 0.0
  %380 = vmatmul.mubr.f32.gmra.mrb[0].mxu0 %v311
  %v381 = vpop.f32.mrb[0].mxu0
  %v382 = vadd.f32 0.0, %v381
  %v383 = vpop.f32.mrb[0].mxu0
  %384 = vdwg.mxu0
  %385 = vrot.lane.b32.xlu0 %v147, 96
  %v386 = vpop.permute.xlu0 %385
  %v387 = vsel %vm158, %v133, 0
  %v389 = vsel %vm158, %v386, 0
  %391 = vmatprep.subr.mxu0 0.0
  %392 = vmatpush1.xpose.msra.mxu0 %v389
  %393 = vmatprep.subr.mxu0 0.0
  %394 = vmatpush1.xpose.msra.mxu0 0.0
  %395 = vmatprep.subr.mxu0 0.0
  %396 = vmatpush1.xpose.msra.mxu0 0.0
  %397 = vmatprep.subr.mxu0 0.0
  %398 = vmatpush1.xpose.msra.mxu0 0.0
  %399 = vmatprep.subr.mxu0 0.0
  %400 = vmatpush1.xpose.msra.mxu0 0.0
  %401 = vmatprep.subr.mxu0 0.0
  %402 = vmatpush1.xpose.msra.mxu0 0.0
  %403 = vmatprep.subr.mxu0 0.0
  %404 = vmatpush1.xpose.msra.mxu0 0.0
  %405 = vmatprep.subr.mxu0 0.0
  %406 = vmatpush1.xpose.msra.mxu0 0.0
  %407 = vmatprep.subr.mxu0 0.0
  %408 = vmatpush1.xpose.msra.mxu0 0.0
  %409 = vmatprep.subr.mxu0 0.0
  %410 = vmatpush1.xpose.msra.mxu0 0.0
  %411 = vmatprep.subr.mxu0 0.0
  %412 = vmatpush1.xpose.msra.mxu0 0.0
  %413 = vmatprep.subr.mxu0 0.0
  %414 = vmatpush1.xpose.msra.mxu0 0.0
  %415 = vmatprep.subr.mxu0 0.0
  %416 = vmatpush1.xpose.msra.mxu0 0.0
  %417 = vmatprep.subr.mxu0 0.0
  %418 = vmatpush1.xpose.msra.mxu0 0.0
  %419 = vmatprep.subr.mxu0 0.0
  %420 = vmatpush1.xpose.msra.mxu0 0.0
  %421 = vmatprep.subr.mxu0 0.0
  %422 = vmatpush1.xpose.msra.mxu0 0.0
  %423 = vmatprep.subr.mxu0 0.0
  %424 = vmatpush1.xpose.msra.mxu0 0.0
  %425 = vmatprep.subr.mxu0 0.0
  %426 = vmatpush1.xpose.msra.mxu0 0.0
  %427 = vmatprep.subr.mxu0 0.0
  %428 = vmatpush1.xpose.msra.mxu0 0.0
  %429 = vmatprep.subr.mxu0 0.0
  %430 = vmatpush1.xpose.msra.mxu0 0.0
  %431 = vmatprep.subr.mxu0 0.0
  %432 = vmatpush1.xpose.msra.mxu0 0.0
  %433 = vmatprep.subr.mxu0 0.0
  %434 = vmatpush1.xpose.msra.mxu0 0.0
  %435 = vmatprep.subr.mxu0 0.0
  %436 = vmatpush1.xpose.msra.mxu0 0.0
  %437 = vmatprep.subr.mxu0 0.0
  %438 = vmatpush1.xpose.msra.mxu0 0.0
  %439 = vmatprep.subr.mxu0 0.0
  %440 = vmatpush1.xpose.msra.mxu0 0.0
  %441 = vmatprep.subr.mxu0 0.0
  %442 = vmatpush1.xpose.msra.mxu0 0.0
  %443 = vmatprep.subr.mxu0 0.0
  %444 = vmatpush1.xpose.msra.mxu0 0.0
  %445 = vmatprep.subr.mxu0 0.0
  %446 = vmatpush1.xpose.msra.mxu0 0.0
  %447 = vmatprep.subr.mxu0 0.0
  %448 = vmatpush1.xpose.msra.mxu0 0.0
  %449 = vmatprep.subr.mxu0 0.0
  %450 = vmatpush1.xpose.msra.mxu0 0.0
  %451 = vmatprep.subr.mxu0 0.0
  %452 = vmatpush1.xpose.msra.mxu0 0.0
  %453 = vmatprep.subr.mxu0 0.0
  %454 = vmatpush1.xpose.msra.mxu0 0.0
  %455 = vmatprep.mubr.f32.mxu0 0.0
  %456 = vmatmul.mubr.f32.gmra.mrb[0].mxu0 %v387
  %v457 = vpop.f32.mrb[0].mxu0
  %v458 = vadd.f32 0.0, %v457
  %v459 = vpop.f32.mrb[0].mxu0
  %460 = vdwg.mxu0
  %461 = vrot.lane.b32.xlu0 %v149, 96
  %v462 = vpop.permute.xlu0 %461
  %v463 = vsel %vm158, %v135, 0
  %v465 = vsel %vm158, %v462, 0
  %467 = vmatprep.subr.mxu0 0.0
  %468 = vmatpush1.xpose.msra.mxu0 %v465
  %469 = vmatprep.subr.mxu0 0.0
  %470 = vmatpush1.xpose.msra.mxu0 0.0
  %471 = vmatprep.subr.mxu0 0.0
  %472 = vmatpush1.xpose.msra.mxu0 0.0
  %473 = vmatprep.subr.mxu0 0.0
  %474 = vmatpush1.xpose.msra.mxu0 0.0
  %475 = vmatprep.subr.mxu0 0.0
  %476 = vmatpush1.xpose.msra.mxu0 0.0
  %477 = vmatprep.subr.mxu0 0.0
  %478 = vmatpush1.xpose.msra.mxu0 0.0
  %479 = vmatprep.subr.mxu0 0.0
  %480 = vmatpush1.xpose.msra.mxu0 0.0
  %481 = vmatprep.subr.mxu0 0.0
  %482 = vmatpush1.xpose.msra.mxu0 0.0
  %483 = vmatprep.subr.mxu0 0.0
  %484 = vmatpush1.xpose.msra.mxu0 0.0
  %485 = vmatprep.subr.mxu0 0.0
  %486 = vmatpush1.xpose.msra.mxu0 0.0
  %487 = vmatprep.subr.mxu0 0.0
  %488 = vmatpush1.xpose.msra.mxu0 0.0
  %489 = vmatprep.subr.mxu0 0.0
  %490 = vmatpush1.xpose.msra.mxu0 0.0
  %491 = vmatprep.subr.mxu0 0.0
  %492 = vmatpush1.xpose.msra.mxu0 0.0
  %493 = vmatprep.subr.mxu0 0.0
  %494 = vmatpush1.xpose.msra.mxu0 0.0
  %495 = vmatprep.subr.mxu0 0.0
  %496 = vmatpush1.xpose.msra.mxu0 0.0
  %497 = vmatprep.subr.mxu0 0.0
  %498 = vmatpush1.xpose.msra.mxu0 0.0
  %499 = vmatprep.subr.mxu0 0.0
  %500 = vmatpush1.xpose.msra.mxu0 0.0
  %501 = vmatprep.subr.mxu0 0.0
  %502 = vmatpush1.xpose.msra.mxu0 0.0
  %503 = vmatprep.subr.mxu0 0.0
  %504 = vmatpush1.xpose.msra.mxu0 0.0
  %505 = vmatprep.subr.mxu0 0.0
  %506 = vmatpush1.xpose.msra.mxu0 0.0
  %507 = vmatprep.subr.mxu0 0.0
  %508 = vmatpush1.xpose.msra.mxu0 0.0
  %509 = vmatprep.subr.mxu0 0.0
  %510 = vmatpush1.xpose.msra.mxu0 0.0
  %511 = vmatprep.subr.mxu0 0.0
  %512 = vmatpush1.xpose.msra.mxu0 0.0
  %513 = vmatprep.subr.mxu0 0.0
  %514 = vmatpush1.xpose.msra.mxu0 0.0
  %515 = vmatprep.subr.mxu0 0.0
  %516 = vmatpush1.xpose.msra.mxu0 0.0
  %517 = vmatprep.subr.mxu0 0.0
  %518 = vmatpush1.xpose.msra.mxu0 0.0
  %519 = vmatprep.subr.mxu0 0.0
  %520 = vmatpush1.xpose.msra.mxu0 0.0
  %521 = vmatprep.subr.mxu0 0.0
  %522 = vmatpush1.xpose.msra.mxu0 0.0
  %523 = vmatprep.subr.mxu0 0.0
  %524 = vmatpush1.xpose.msra.mxu0 0.0
  %525 = vmatprep.subr.mxu0 0.0
  %526 = vmatpush1.xpose.msra.mxu0 0.0
  %527 = vmatprep.subr.mxu0 0.0
  %528 = vmatpush1.xpose.msra.mxu0 0.0
  %529 = vmatprep.subr.mxu0 0.0
  %530 = vmatpush1.xpose.msra.mxu0 0.0
  %531 = vmatprep.mubr.f32.mxu0 0.0
  %532 = vmatmul.mubr.f32.gmra.mrb[0].mxu0 %v463
  %v533 = vpop.f32.mrb[0].mxu0
  %v534 = vadd.f32 0.0, %v533
  %v535 = vpop.f32.mrb[0].mxu0
  %536 = vdwg.mxu0
  %537 = vrot.lane.b32.xlu0 %v151, 96
  %v538 = vpop.permute.xlu0 %537
  %v539 = vsel %vm158, %v137, 0
  %v541 = vsel %vm158, %v538, 0
  %543 = vmatprep.subr.mxu0 0.0
  %544 = vmatpush1.xpose.msra.mxu0 %v541
  %545 = vmatprep.subr.mxu0 0.0
  %546 = vmatpush1.xpose.msra.mxu0 0.0
  %547 = vmatprep.subr.mxu0 0.0
  %548 = vmatpush1.xpose.msra.mxu0 0.0
  %549 = vmatprep.subr.mxu0 0.0
  %550 = vmatpush1.xpose.msra.mxu0 0.0
  %551 = vmatprep.subr.mxu0 0.0
  %552 = vmatpush1.xpose.msra.mxu0 0.0
  %553 = vmatprep.subr.mxu0 0.0
  %554 = vmatpush1.xpose.msra.mxu0 0.0
  %555 = vmatprep.subr.mxu0 0.0
  %556 = vmatpush1.xpose.msra.mxu0 0.0
  %557 = vmatprep.subr.mxu0 0.0
  %558 = vmatpush1.xpose.msra.mxu0 0.0
  %559 = vmatprep.subr.mxu0 0.0
  %560 = vmatpush1.xpose.msra.mxu0 0.0
  %561 = vmatprep.subr.mxu0 0.0
  %562 = vmatpush1.xpose.msra.mxu0 0.0
  %563 = vmatprep.subr.mxu0 0.0
  %564 = vmatpush1.xpose.msra.mxu0 0.0
  %565 = vmatprep.subr.mxu0 0.0
  %566 = vmatpush1.xpose.msra.mxu0 0.0
  %567 = vmatprep.subr.mxu0 0.0
  %568 = vmatpush1.xpose.msra.mxu0 0.0
  %569 = vmatprep.subr.mxu0 0.0
  %570 = vmatpush1.xpose.msra.mxu0 0.0
  %571 = vmatprep.subr.mxu0 0.0
  %572 = vmatpush1.xpose.msra.mxu0 0.0
  %573 = vmatprep.subr.mxu0 0.0
  %574 = vmatpush1.xpose.msra.mxu0 0.0
  %575 = vmatprep.subr.mxu0 0.0
  %576 = vmatpush1.xpose.msra.mxu0 0.0
  %577 = vmatprep.subr.mxu0 0.0
  %578 = vmatpush1.xpose.msra.mxu0 0.0
  %579 = vmatprep.subr.mxu0 0.0
  %580 = vmatpush1.xpose.msra.mxu0 0.0
  %581 = vmatprep.subr.mxu0 0.0
  %582 = vmatpush1.xpose.msra.mxu0 0.0
  %583 = vmatprep.subr.mxu0 0.0
  %584 = vmatpush1.xpose.msra.mxu0 0.0
  %585 = vmatprep.subr.mxu0 0.0
  %586 = vmatpush1.xpose.msra.mxu0 0.0
  %587 = vmatprep.subr.mxu0 0.0
  %588 = vmatpush1.xpose.msra.mxu0 0.0
  %589 = vmatprep.subr.mxu0 0.0
  %590 = vmatpush1.xpose.msra.mxu0 0.0
  %591 = vmatprep.subr.mxu0 0.0
  %592 = vmatpush1.xpose.msra.mxu0 0.0
  %593 = vmatprep.subr.mxu0 0.0
  %594 = vmatpush1.xpose.msra.mxu0 0.0
  %595 = vmatprep.subr.mxu0 0.0
  %596 = vmatpush1.xpose.msra.mxu0 0.0
  %597 = vmatprep.subr.mxu0 0.0
  %598 = vmatpush1.xpose.msra.mxu0 0.0
  %599 = vmatprep.subr.mxu0 0.0
  %600 = vmatpush1.xpose.msra.mxu0 0.0
  %601 = vmatprep.subr.mxu0 0.0
  %602 = vmatpush1.xpose.msra.mxu0 0.0
  %603 = vmatprep.subr.mxu0 0.0
  %604 = vmatpush1.xpose.msra.mxu0 0.0
  %605 = vmatprep.subr.mxu0 0.0
  %606 = vmatpush1.xpose.msra.mxu0 0.0
  %607 = vmatprep.mubr.f32.mxu0 0.0
  %608 = vmatmul.mubr.f32.gmra.mrb[0].mxu0 %v539
  %v609 = vpop.f32.mrb[0].mxu0
  %v610 = vadd.f32 0.0, %v609
  %v611 = vpop.f32.mrb[0].mxu0
  %612 = vdwg.mxu0
  %613 = vrot.lane.b32.xlu0 %v153, 96
  %v614 = vpop.permute.xlu0 %613
  %v615 = vsel %vm158, %v139, 0
  %v617 = vsel %vm158, %v614, 0
  %619 = vmatprep.subr.mxu0 0.0
  %620 = vmatpush1.xpose.msra.mxu0 %v617
  %621 = vmatprep.subr.mxu0 0.0
  %622 = vmatpush1.xpose.msra.mxu0 0.0
  %623 = vmatprep.subr.mxu0 0.0
  %624 = vmatpush1.xpose.msra.mxu0 0.0
  %625 = vmatprep.subr.mxu0 0.0
  %626 = vmatpush1.xpose.msra.mxu0 0.0
  %627 = vmatprep.subr.mxu0 0.0
  %628 = vmatpush1.xpose.msra.mxu0 0.0
  %629 = vmatprep.subr.mxu0 0.0
  %630 = vmatpush1.xpose.msra.mxu0 0.0
  %631 = vmatprep.subr.mxu0 0.0
  %632 = vmatpush1.xpose.msra.mxu0 0.0
  %633 = vmatprep.subr.mxu0 0.0
  %634 = vmatpush1.xpose.msra.mxu0 0.0
  %635 = vmatprep.subr.mxu0 0.0
  %636 = vmatpush1.xpose.msra.mxu0 0.0
  %637 = vmatprep.subr.mxu0 0.0
  %638 = vmatpush1.xpose.msra.mxu0 0.0
  %639 = vmatprep.subr.mxu0 0.0
  %640 = vmatpush1.xpose.msra.mxu0 0.0
  %641 = vmatprep.subr.mxu0 0.0
  %642 = vmatpush1.xpose.msra.mxu0 0.0
  %643 = vmatprep.subr.mxu0 0.0
  %644 = vmatpush1.xpose.msra.mxu0 0.0
  %645 = vmatprep.subr.mxu0 0.0
  %646 = vmatpush1.xpose.msra.mxu0 0.0
  %647 = vmatprep.subr.mxu0 0.0
  %648 = vmatpush1.xpose.msra.mxu0 0.0
  %649 = vmatprep.subr.mxu0 0.0
  %650 = vmatpush1.xpose.msra.mxu0 0.0
  %651 = vmatprep.subr.mxu0 0.0
  %652 = vmatpush1.xpose.msra.mxu0 0.0
  %653 = vmatprep.subr.mxu0 0.0
  %654 = vmatpush1.xpose.msra.mxu0 0.0
  %655 = vmatprep.subr.mxu0 0.0
  %656 = vmatpush1.xpose.msra.mxu0 0.0
  %657 = vmatprep.subr.mxu0 0.0
  %658 = vmatpush1.xpose.msra.mxu0 0.0
  %659 = vmatprep.subr.mxu0 0.0
  %660 = vmatpush1.xpose.msra.mxu0 0.0
  %661 = vmatprep.subr.mxu0 0.0
  %662 = vmatpush1.xpose.msra.mxu0 0.0
  %663 = vmatprep.subr.mxu0 0.0
  %664 = vmatpush1.xpose.msra.mxu0 0.0
  %665 = vmatprep.subr.mxu0 0.0
  %666 = vmatpush1.xpose.msra.mxu0 0.0
  %667 = vmatprep.subr.mxu0 0.0
  %668 = vmatpush1.xpose.msra.mxu0 0.0
  %669 = vmatprep.subr.mxu0 0.0
  %670 = vmatpush1.xpose.msra.mxu0 0.0
  %671 = vmatprep.subr.mxu0 0.0
  %672 = vmatpush1.xpose.msra.mxu0 0.0
  %673 = vmatprep.subr.mxu0 0.0
  %674 = vmatpush1.xpose.msra.mxu0 0.0
  %675 = vmatprep.subr.mxu0 0.0
  %676 = vmatpush1.xpose.msra.mxu0 0.0
  %677 = vmatprep.subr.mxu0 0.0
  %678 = vmatpush1.xpose.msra.mxu0 0.0
  %679 = vmatprep.subr.mxu0 0.0
  %680 = vmatpush1.xpose.msra.mxu0 0.0
  %681 = vmatprep.subr.mxu0 0.0
  %682 = vmatpush1.xpose.msra.mxu0 0.0
  %683 = vmatprep.mubr.f32.mxu0 0.0
  %684 = vmatmul.mubr.f32.gmra.mrb[0].mxu0 %v615
  %v685 = vpop.f32.mrb[0].mxu0
  %v686 = vadd.f32 0.0, %v685
  %v687 = vpop.f32.mrb[0].mxu0
  %688 = vdwg.mxu0
  %689 = vrot.lane.b32.xlu0 %v155, 96
  %v690 = vpop.permute.xlu0 %689
  %v691 = vsel %vm158, %v141, 0
  %v693 = vsel %vm158, %v690, 0
  %695 = vmatprep.subr.mxu0 0.0
  %696 = vmatpush1.xpose.msra.mxu0 %v693
  %697 = vmatprep.subr.mxu0 0.0
  %698 = vmatpush1.xpose.msra.mxu0 0.0
  %699 = vmatprep.subr.mxu0 0.0
  %700 = vmatpush1.xpose.msra.mxu0 0.0
  %701 = vmatprep.subr.mxu0 0.0
  %702 = vmatpush1.xpose.msra.mxu0 0.0
  %703 = vmatprep.subr.mxu0 0.0
  %704 = vmatpush1.xpose.msra.mxu0 0.0
  %705 = vmatprep.subr.mxu0 0.0
  %706 = vmatpush1.xpose.msra.mxu0 0.0
  %707 = vmatprep.subr.mxu0 0.0
  %708 = vmatpush1.xpose.msra.mxu0 0.0
  %709 = vmatprep.subr.mxu0 0.0
  %710 = vmatpush1.xpose.msra.mxu0 0.0
  %711 = vmatprep.subr.mxu0 0.0
  %712 = vmatpush1.xpose.msra.mxu0 0.0
  %713 = vmatprep.subr.mxu0 0.0
  %714 = vmatpush1.xpose.msra.mxu0 0.0
  %715 = vmatprep.subr.mxu0 0.0
  %716 = vmatpush1.xpose.msra.mxu0 0.0
  %717 = vmatprep.subr.mxu0 0.0
  %718 = vmatpush1.xpose.msra.mxu0 0.0
  %719 = vmatprep.subr.mxu0 0.0
  %720 = vmatpush1.xpose.msra.mxu0 0.0
  %721 = vmatprep.subr.mxu0 0.0
  %722 = vmatpush1.xpose.msra.mxu0 0.0
  %723 = vmatprep.subr.mxu0 0.0
  %724 = vmatpush1.xpose.msra.mxu0 0.0
  %725 = vmatprep.subr.mxu0 0.0
  %726 = vmatpush1.xpose.msra.mxu0 0.0
  %727 = vmatprep.subr.mxu0 0.0
  %728 = vmatpush1.xpose.msra.mxu0 0.0
  %729 = vmatprep.subr.mxu0 0.0
  %730 = vmatpush1.xpose.msra.mxu0 0.0
  %731 = vmatprep.subr.mxu0 0.0
  %732 = vmatpush1.xpose.msra.mxu0 0.0
  %733 = vmatprep.subr.mxu0 0.0
  %734 = vmatpush1.xpose.msra.mxu0 0.0
  %735 = vmatprep.subr.mxu0 0.0
  %736 = vmatpush1.xpose.msra.mxu0 0.0
  %737 = vmatprep.subr.mxu0 0.0
  %738 = vmatpush1.xpose.msra.mxu0 0.0
  %739 = vmatprep.subr.mxu0 0.0
  %740 = vmatpush1.xpose.msra.mxu0 0.0
  %741 = vmatprep.subr.mxu0 0.0
  %742 = vmatpush1.xpose.msra.mxu0 0.0
  %743 = vmatprep.subr.mxu0 0.0
  %744 = vmatpush1.xpose.msra.mxu0 0.0
  %745 = vmatprep.subr.mxu0 0.0
  %746 = vmatpush1.xpose.msra.mxu0 0.0
  %747 = vmatprep.subr.mxu0 0.0
  %748 = vmatpush1.xpose.msra.mxu0 0.0
  %749 = vmatprep.subr.mxu0 0.0
  %750 = vmatpush1.xpose.msra.mxu0 0.0
  %751 = vmatprep.subr.mxu0 0.0
  %752 = vmatpush1.xpose.msra.mxu0 0.0
  %753 = vmatprep.subr.mxu0 0.0
  %754 = vmatpush1.xpose.msra.mxu0 0.0
  %755 = vmatprep.subr.mxu0 0.0
  %756 = vmatpush1.xpose.msra.mxu0 0.0
  %757 = vmatprep.subr.mxu0 0.0
  %758 = vmatpush1.xpose.msra.mxu0 0.0
  %759 = vmatprep.mubr.f32.mxu0 0.0
  %760 = vmatmul.mubr.f32.gmra.mrb[0].mxu0 %v691
  %v761 = vpop.f32.mrb[0].mxu0
  %v762 = vadd.f32 0.0, %v761
  %v763 = vpop.f32.mrb[0].mxu0
  %764 = vdwg.mxu0
  %v765 = vsel %vm158, %v230, -inf
  %766 = vmax.xlane.f32.xlu0 %v765
  %v767 = vpop.xlane.xlu0 %766
  %v768 = vsel %vm158, %v306, -inf
  %769 = vmax.xlane.f32.xlu0 %v768
  %v770 = vpop.xlane.xlu0 %769
  %v771 = vsel %vm158, %v382, -inf
  %772 = vmax.xlane.f32.xlu0 %v771
  %v773 = vpop.xlane.xlu0 %772
  %v774 = vsel %vm158, %v458, -inf
  %775 = vmax.xlane.f32.xlu0 %v774
  %v776 = vpop.xlane.xlu0 %775
  %v777 = vsel %vm158, %v534, -inf
  %778 = vmax.xlane.f32.xlu0 %v777
  %v779 = vpop.xlane.xlu0 %778
  %v780 = vsel %vm158, %v610, -inf
  %781 = vmax.xlane.f32.xlu0 %v780
  %v782 = vpop.xlane.xlu0 %781
  %v783 = vsel %vm158, %v686, -inf
  %784 = vmax.xlane.f32.xlu0 %v783
  %v785 = vpop.xlane.xlu0 %784
  %v786 = vsel %vm158, %v762, -inf
  %787 = vmax.xlane.f32.xlu0 %v786
  %v788 = vpop.xlane.xlu0 %787
  %v789 = vsub.f32 %v230, %v767
  %v790 = vsub.f32 %v306, %v770
  %v791 = vsub.f32 %v382, %v773
  %v792 = vsub.f32 %v458, %v776
  %v793 = vsub.f32 %v534, %v779
  %v794 = vsub.f32 %v610, %v782
  %v795 = vsub.f32 %v686, %v785
  %v796 = vsub.f32 %v762, %v788
  %v797 = vmul.f32 %v789, 1.442695
  %v798 = vpow.pop %v797
  %v799 = vmul.f32 %v790, 1.442695
  %v800 = vpow.pop %v799
  %v801 = vmul.f32 %v791, 1.442695
  %v802 = vpow.pop %v801
  %v803 = vmul.f32 %v792, 1.442695
  %v804 = vpow.pop %v803
  %v805 = vmul.f32 %v793, 1.442695
  %v806 = vpow.pop %v805
  %v807 = vmul.f32 %v794, 1.442695
  %v808 = vpow.pop %v807
  %v809 = vmul.f32 %v795, 1.442695
  %v810 = vpow.pop %v809
  %v811 = vmul.f32 %v796, 1.442695
  %v812 = vpow.pop %v811
  %v813 = vsel %vm158, %v798, 0.0
  %814 = vadd.xlane.f32.xlu0 %v813
  %v815 = vpop.xlane.xlu0 %814
  %v816 = vsel %vm158, %v800, 0.0
  %817 = vadd.xlane.f32.xlu0 %v816
  %v818 = vpop.xlane.xlu0 %817
  %v819 = vsel %vm158, %v802, 0.0
  %820 = vadd.xlane.f32.xlu0 %v819
  %v821 = vpop.xlane.xlu0 %820
  %v822 = vsel %vm158, %v804, 0.0
  %823 = vadd.xlane.f32.xlu0 %v822
  %v824 = vpop.xlane.xlu0 %823
  %v825 = vsel %vm158, %v806, 0.0
  %826 = vadd.xlane.f32.xlu0 %v825
  %v827 = vpop.xlane.xlu0 %826
  %v828 = vsel %vm158, %v808, 0.0
  %829 = vadd.xlane.f32.xlu0 %v828
  %v830 = vpop.xlane.xlu0 %829
  %v831 = vsel %vm158, %v810, 0.0
  %832 = vadd.xlane.f32.xlu0 %v831
  %v833 = vpop.xlane.xlu0 %832
  %v834 = vsel %vm158, %v812, 0.0
  %835 = vadd.xlane.f32.xlu0 %v834
  %v836 = vpop.xlane.xlu0 %835
  %v837 = vrcp.pop %v815
  %v838 = vmul.f32 %v798, %v837
  %v839 = vrcp.pop %v818
  %v840 = vmul.f32 %v800, %v839
  %v841 = vrcp.pop %v821
  %v842 = vmul.f32 %v802, %v841
  %v843 = vrcp.pop %v824
  %v844 = vmul.f32 %v804, %v843
  %v845 = vrcp.pop %v827
  %v846 = vmul.f32 %v806, %v845
  %v847 = vrcp.pop %v830
  %v848 = vmul.f32 %v808, %v847
  %v849 = vrcp.pop %v833
  %v850 = vmul.f32 %v810, %v849
  %v851 = vrcp.pop %v836
  %v852 = vmul.f32 %v812, %v851
  %853 = vrot.lane.b32.xlu0 %v120, 64
  %v854 = vpop.permute.xlu0 %853
  %v857 = vsel %vm158, %v838, 0
  %859 = vmatprep.subr.mxu0 0.0
  %860 = vmatpush1.msra.mxu0 %v854
  %861 = vmatprep.subr.mxu0 0.0
  %862 = vmatpush1.msra.mxu0 0.0
  %863 = vmatprep.subr.mxu0 0.0
  %864 = vmatpush1.msra.mxu0 0.0
  %865 = vmatprep.subr.mxu0 0.0
  %866 = vmatpush1.msra.mxu0 0.0
  %867 = vmatprep.subr.mxu0 0.0
  %868 = vmatpush1.msra.mxu0 0.0
  %869 = vmatprep.subr.mxu0 0.0
  %870 = vmatpush1.msra.mxu0 0.0
  %871 = vmatprep.subr.mxu0 0.0
  %872 = vmatpush1.msra.mxu0 0.0
  %873 = vmatprep.subr.mxu0 0.0
  %874 = vmatpush1.msra.mxu0 0.0
  %875 = vmatprep.subr.mxu0 0.0
  %876 = vmatpush1.msra.mxu0 0.0
  %877 = vmatprep.subr.mxu0 0.0
  %878 = vmatpush1.msra.mxu0 0.0
  %879 = vmatprep.subr.mxu0 0.0
  %880 = vmatpush1.msra.mxu0 0.0
  %881 = vmatprep.subr.mxu0 0.0
  %882 = vmatpush1.msra.mxu0 0.0
  %883 = vmatprep.subr.mxu0 0.0
  %884 = vmatpush1.msra.mxu0 0.0
  %885 = vmatprep.subr.mxu0 0.0
  %886 = vmatpush1.msra.mxu0 0.0
  %887 = vmatprep.subr.mxu0 0.0
  %888 = vmatpush1.msra.mxu0 0.0
  %889 = vmatprep.subr.mxu0 0.0
  %890 = vmatpush1.msra.mxu0 0.0
  %891 = vmatprep.subr.mxu0 0.0
  %892 = vmatpush1.msra.mxu0 0.0
  %893 = vmatprep.subr.mxu0 0.0
  %894 = vmatpush1.msra.mxu0 0.0
  %895 = vmatprep.subr.mxu0 0.0
  %896 = vmatpush1.msra.mxu0 0.0
  %897 = vmatprep.subr.mxu0 0.0
  %898 = vmatpush1.msra.mxu0 0.0
  %899 = vmatprep.subr.mxu0 0.0
  %900 = vmatpush1.msra.mxu0 0.0
  %901 = vmatprep.subr.mxu0 0.0
  %902 = vmatpush1.msra.mxu0 0.0
  %903 = vmatprep.subr.mxu0 0.0
  %904 = vmatpush1.msra.mxu0 0.0
  %905 = vmatprep.subr.mxu0 0.0
  %906 = vmatpush1.msra.mxu0 0.0
  %907 = vmatprep.subr.mxu0 0.0
  %908 = vmatpush1.msra.mxu0 0.0
  %909 = vmatprep.subr.mxu0 0.0
  %910 = vmatpush1.msra.mxu0 0.0
  %911 = vmatprep.subr.mxu0 0.0
  %912 = vmatpush1.msra.mxu0 0.0
  %913 = vmatprep.subr.mxu0 0.0
  %914 = vmatpush1.msra.mxu0 0.0
  %915 = vmatprep.subr.mxu0 0.0
  %916 = vmatpush1.msra.mxu0 0.0
  %917 = vmatprep.subr.mxu0 0.0
  %918 = vmatpush1.msra.mxu0 0.0
  %919 = vmatprep.subr.mxu0 0.0
  %920 = vmatpush1.msra.mxu0 0.0
  %921 = vmatprep.subr.mxu0 0.0
  %922 = vmatpush1.msra.mxu0 0.0
  %923 = vmatprep.mubr.f32.mxu0 0.0
  %924 = vmatmul.mubr.f32.gmra.mrb[0].mxu0 %v857
  %v925 = vpop.f32.mrb[0].mxu0
  %v926 = vadd.f32 0.0, %v925
  %v927 = vpop.f32.mrb[0].mxu0
  %928 = vdwg.mxu0
  %929 = vrot.lane.b32.xlu0 %v125, 64
  %v930 = vpop.permute.xlu0 %929
  %v933 = vsel %vm158, %v840, 0
  %935 = vmatprep.subr.mxu0 0.0
  %936 = vmatpush1.msra.mxu0 %v930
  %937 = vmatprep.subr.mxu0 0.0
  %938 = vmatpush1.msra.mxu0 0.0
  %939 = vmatprep.subr.mxu0 0.0
  %940 = vmatpush1.msra.mxu0 0.0
  %941 = vmatprep.subr.mxu0 0.0
  %942 = vmatpush1.msra.mxu0 0.0
  %943 = vmatprep.subr.mxu0 0.0
  %944 = vmatpush1.msra.mxu0 0.0
  %945 = vmatprep.subr.mxu0 0.0
  %946 = vmatpush1.msra.mxu0 0.0
  %947 = vmatprep.subr.mxu0 0.0
  %948 = vmatpush1.msra.mxu0 0.0
  %949 = vmatprep.subr.mxu0 0.0
  %950 = vmatpush1.msra.mxu0 0.0
  %951 = vmatprep.subr.mxu0 0.0
  %952 = vmatpush1.msra.mxu0 0.0
  %953 = vmatprep.subr.mxu0 0.0
  %954 = vmatpush1.msra.mxu0 0.0
  %955 = vmatprep.subr.mxu0 0.0
  %956 = vmatpush1.msra.mxu0 0.0
  %957 = vmatprep.subr.mxu0 0.0
  %958 = vmatpush1.msra.mxu0 0.0
  %959 = vmatprep.subr.mxu0 0.0
  %960 = vmatpush1.msra.mxu0 0.0
  %961 = vmatprep.subr.mxu0 0.0
  %962 = vmatpush1.msra.mxu0 0.0
  %963 = vmatprep.subr.mxu0 0.0
  %964 = vmatpush1.msra.mxu0 0.0
  %965 = vmatprep.subr.mxu0 0.0
  %966 = vmatpush1.msra.mxu0 0.0
  %967 = vmatprep.subr.mxu0 0.0
  %968 = vmatpush1.msra.mxu0 0.0
  %969 = vmatprep.subr.mxu0 0.0
  %970 = vmatpush1.msra.mxu0 0.0
  %971 = vmatprep.subr.mxu0 0.0
  %972 = vmatpush1.msra.mxu0 0.0
  %973 = vmatprep.subr.mxu0 0.0
  %974 = vmatpush1.msra.mxu0 0.0
  %975 = vmatprep.subr.mxu0 0.0
  %976 = vmatpush1.msra.mxu0 0.0
  %977 = vmatprep.subr.mxu0 0.0
  %978 = vmatpush1.msra.mxu0 0.0
  %979 = vmatprep.subr.mxu0 0.0
  %980 = vmatpush1.msra.mxu0 0.0
  %981 = vmatprep.subr.mxu0 0.0
  %982 = vmatpush1.msra.mxu0 0.0
  %983 = vmatprep.subr.mxu0 0.0
  %984 = vmatpush1.msra.mxu0 0.0
  %985 = vmatprep.subr.mxu0 0.0
  %986 = vmatpush1.msra.mxu0 0.0
  %987 = vmatprep.subr.mxu0 0.0
  %988 = vmatpush1.msra.mxu0 0.0
  %989 = vmatprep.subr.mxu0 0.0
  %990 = vmatpush1.msra.mxu0 0.0
  %991 = vmatprep.subr.mxu0 0.0
  %992 = vmatpush1.msra.mxu0 0.0
  %993 = vmatprep.subr.mxu0 0.0
  %994 = vmatpush1.msra.mxu0 0.0
  %995 = vmatprep.subr.mxu0 0.0
  %996 = vmatpush1.msra.mxu0 0.0
  %997 = vmatprep.subr.mxu0 0.0
  %998 = vmatpush1.msra.mxu0 0.0
  %999 = vmatprep.mubr.f32.mxu0 0.0
  %1000 = vmatmul.mubr.f32.gmra.mrb[0].mxu0 %v933
  %v1001 = vpop.f32.mrb[0].mxu0
  %v1002 = vadd.f32 0.0, %v1001
  %v1003 = vpop.f32.mrb[0].mxu0
  %1004 = vdwg.mxu0
  %1005 = vrot.lane.b32.xlu0 %v145, 64
  %v1006 = vpop.permute.xlu0 %1005
  %v1009 = vsel %vm158, %v842, 0
  %1011 = vmatprep.subr.mxu0 0.0
  %1012 = vmatpush1.msra.mxu0 %v1006
  %1013 = vmatprep.subr.mxu0 0.0
  %1014 = vmatpush1.msra.mxu0 0.0
  %1015 = vmatprep.subr.mxu0 0.0
  %1016 = vmatpush1.msra.mxu0 0.0
  %1017 = vmatprep.subr.mxu0 0.0
  %1018 = vmatpush1.msra.mxu0 0.0
  %1019 = vmatprep.subr.mxu0 0.0
  %1020 = vmatpush1.msra.mxu0 0.0
  %1021 = vmatprep.subr.mxu0 0.0
  %1022 = vmatpush1.msra.mxu0 0.0
  %1023 = vmatprep.subr.mxu0 0.0
  %1024 = vmatpush1.msra.mxu0 0.0
  %1025 = vmatprep.subr.mxu0 0.0
  %1026 = vmatpush1.msra.mxu0 0.0
  %1027 = vmatprep.subr.mxu0 0.0
  %1028 = vmatpush1.msra.mxu0 0.0
  %1029 = vmatprep.subr.mxu0 0.0
  %1030 = vmatpush1.msra.mxu0 0.0
  %1031 = vmatprep.subr.mxu0 0.0
  %1032 = vmatpush1.msra.mxu0 0.0
  %1033 = vmatprep.subr.mxu0 0.0
  %1034 = vmatpush1.msra.mxu0 0.0
  %1035 = vmatprep.subr.mxu0 0.0
  %1036 = vmatpush1.msra.mxu0 0.0
  %1037 = vmatprep.subr.mxu0 0.0
  %1038 = vmatpush1.msra.mxu0 0.0
  %1039 = vmatprep.subr.mxu0 0.0
  %1040 = vmatpush1.msra.mxu0 0.0
  %1041 = vmatprep.subr.mxu0 0.0
  %1042 = vmatpush1.msra.mxu0 0.0
  %1043 = vmatprep.subr.mxu0 0.0
  %1044 = vmatpush1.msra.mxu0 0.0
  %1045 = vmatprep.subr.mxu0 0.0
  %1046 = vmatpush1.msra.mxu0 0.0
  %1047 = vmatprep.subr.mxu0 0.0
  %1048 = vmatpush1.msra.mxu0 0.0
  %1049 = vmatprep.subr.mxu0 0.0
  %1050 = vmatpush1.msra.mxu0 0.0
  %1051 = vmatprep.subr.mxu0 0.0
  %1052 = vmatpush1.msra.mxu0 0.0
  %1053 = vmatprep.subr.mxu0 0.0
  %1054 = vmatpush1.msra.mxu0 0.0
  %1055 = vmatprep.subr.mxu0 0.0
  %1056 = vmatpush1.msra.mxu0 0.0
  %1057 = vmatprep.subr.mxu0 0.0
  %1058 = vmatpush1.msra.mxu0 0.0
  %1059 = vmatprep.subr.mxu0 0.0
  %1060 = vmatpush1.msra.mxu0 0.0
  %1061 = vmatprep.subr.mxu0 0.0
  %1062 = vmatpush1.msra.mxu0 0.0
  %1063 = vmatprep.subr.mxu0 0.0
  %1064 = vmatpush1.msra.mxu0 0.0
  %1065 = vmatprep.subr.mxu0 0.0
  %1066 = vmatpush1.msra.mxu0 0.0
  %1067 = vmatprep.subr.mxu0 0.0
  %1068 = vmatpush1.msra.mxu0 0.0
  %1069 = vmatprep.subr.mxu0 0.0
  %1070 = vmatpush1.msra.mxu0 0.0
  %1071 = vmatprep.subr.mxu0 0.0
  %1072 = vmatpush1.msra.mxu0 0.0
  %1073 = vmatprep.subr.mxu0 0.0
  %1074 = vmatpush1.msra.mxu0 0.0
  %1075 = vmatprep.mubr.f32.mxu0 0.0
  %1076 = vmatmul.mubr.f32.gmra.mrb[0].mxu0 %v1009
  %v1077 = vpop.f32.mrb[0].mxu0
  %v1078 = vadd.f32 0.0, %v1077
  %v1079 = vpop.f32.mrb[0].mxu0
  %1080 = vdwg.mxu0
  %1081 = vrot.lane.b32.xlu0 %v147, 64
  %v1082 = vpop.permute.xlu0 %1081
  %v1085 = vsel %vm158, %v844, 0
  %1087 = vmatprep.subr.mxu0 0.0
  %1088 = vmatpush1.msra.mxu0 %v1082
  %1089 = vmatprep.subr.mxu0 0.0
  %1090 = vmatpush1.msra.mxu0 0.0
  %1091 = vmatprep.subr.mxu0 0.0
  %1092 = vmatpush1.msra.mxu0 0.0
  %1093 = vmatprep.subr.mxu0 0.0
  %1094 = vmatpush1.msra.mxu0 0.0
  %1095 = vmatprep.subr.mxu0 0.0
  %1096 = vmatpush1.msra.mxu0 0.0
  %1097 = vmatprep.subr.mxu0 0.0
  %1098 = vmatpush1.msra.mxu0 0.0
  %1099 = vmatprep.subr.mxu0 0.0
  %1100 = vmatpush1.msra.mxu0 0.0
  %1101 = vmatprep.subr.mxu0 0.0
  %1102 = vmatpush1.msra.mxu0 0.0
  %1103 = vmatprep.subr.mxu0 0.0
  %1104 = vmatpush1.msra.mxu0 0.0
  %1105 = vmatprep.subr.mxu0 0.0
  %1106 = vmatpush1.msra.mxu0 0.0
  %1107 = vmatprep.subr.mxu0 0.0
  %1108 = vmatpush1.msra.mxu0 0.0
  %1109 = vmatprep.subr.mxu0 0.0
  %1110 = vmatpush1.msra.mxu0 0.0
  %1111 = vmatprep.subr.mxu0 0.0
  %1112 = vmatpush1.msra.mxu0 0.0
  %1113 = vmatprep.subr.mxu0 0.0
  %1114 = vmatpush1.msra.mxu0 0.0
  %1115 = vmatprep.subr.mxu0 0.0
  %1116 = vmatpush1.msra.mxu0 0.0
  %1117 = vmatprep.subr.mxu0 0.0
  %1118 = vmatpush1.msra.mxu0 0.0
  %1119 = vmatprep.subr.mxu0 0.0
  %1120 = vmatpush1.msra.mxu0 0.0
  %1121 = vmatprep.subr.mxu0 0.0
  %1122 = vmatpush1.msra.mxu0 0.0
  %1123 = vmatprep.subr.mxu0 0.0
  %1124 = vmatpush1.msra.mxu0 0.0
  %1125 = vmatprep.subr.mxu0 0.0
  %1126 = vmatpush1.msra.mxu0 0.0
  %1127 = vmatprep.subr.mxu0 0.0
  %1128 = vmatpush1.msra.mxu0 0.0
  %1129 = vmatprep.subr.mxu0 0.0
  %1130 = vmatpush1.msra.mxu0 0.0
  %1131 = vmatprep.subr.mxu0 0.0
  %1132 = vmatpush1.msra.mxu0 0.0
  %1133 = vmatprep.subr.mxu0 0.0
  %1134 = vmatpush1.msra.mxu0 0.0
  %1135 = vmatprep.subr.mxu0 0.0
  %1136 = vmatpush1.msra.mxu0 0.0
  %1137 = vmatprep.subr.mxu0 0.0
  %1138 = vmatpush1.msra.mxu0 0.0
  %1139 = vmatprep.subr.mxu0 0.0
  %1140 = vmatpush1.msra.mxu0 0.0
  %1141 = vmatprep.subr.mxu0 0.0
  %1142 = vmatpush1.msra.mxu0 0.0
  %1143 = vmatprep.subr.mxu0 0.0
  %1144 = vmatpush1.msra.mxu0 0.0
  %1145 = vmatprep.subr.mxu0 0.0
  %1146 = vmatpush1.msra.mxu0 0.0
  %1147 = vmatprep.subr.mxu0 0.0
  %1148 = vmatpush1.msra.mxu0 0.0
  %1149 = vmatprep.subr.mxu0 0.0
  %1150 = vmatpush1.msra.mxu0 0.0
  %1151 = vmatprep.mubr.f32.mxu0 0.0
  %1152 = vmatmul.mubr.f32.gmra.mrb[0].mxu0 %v1085
  %v1153 = vpop.f32.mrb[0].mxu0
  %v1154 = vadd.f32 0.0, %v1153
  %v1155 = vpop.f32.mrb[0].mxu0
  %1156 = vdwg.mxu0
  %1157 = vrot.lane.b32.xlu0 %v149, 64
  %v1158 = vpop.permute.xlu0 %1157
  %v1161 = vsel %vm158, %v846, 0
  %1163 = vmatprep.subr.mxu0 0.0
  %1164 = vmatpush1.msra.mxu0 %v1158
  %1165 = vmatprep.subr.mxu0 0.0
  %1166 = vmatpush1.msra.mxu0 0.0
  %1167 = vmatprep.subr.mxu0 0.0
  %1168 = vmatpush1.msra.mxu0 0.0
  %1169 = vmatprep.subr.mxu0 0.0
  %1170 = vmatpush1.msra.mxu0 0.0
  %1171 = vmatprep.subr.mxu0 0.0
  %1172 = vmatpush1.msra.mxu0 0.0
  %1173 = vmatprep.subr.mxu0 0.0
  %1174 = vmatpush1.msra.mxu0 0.0
  %1175 = vmatprep.subr.mxu0 0.0
  %1176 = vmatpush1.msra.mxu0 0.0
  %1177 = vmatprep.subr.mxu0 0.0
  %1178 = vmatpush1.msra.mxu0 0.0
  %1179 = vmatprep.subr.mxu0 0.0
  %1180 = vmatpush1.msra.mxu0 0.0
  %1181 = vmatprep.subr.mxu0 0.0
  %1182 = vmatpush1.msra.mxu0 0.0
  %1183 = vmatprep.subr.mxu0 0.0
  %1184 = vmatpush1.msra.mxu0 0.0
  %1185 = vmatprep.subr.mxu0 0.0
  %1186 = vmatpush1.msra.mxu0 0.0
  %1187 = vmatprep.subr.mxu0 0.0
  %1188 = vmatpush1.msra.mxu0 0.0
  %1189 = vmatprep.subr.mxu0 0.0
  %1190 = vmatpush1.msra.mxu0 0.0
  %1191 = vmatprep.subr.mxu0 0.0
  %1192 = vmatpush1.msra.mxu0 0.0
  %1193 = vmatprep.subr.mxu0 0.0
  %1194 = vmatpush1.msra.mxu0 0.0
  %1195 = vmatprep.subr.mxu0 0.0
  %1196 = vmatpush1.msra.mxu0 0.0
  %1197 = vmatprep.subr.mxu0 0.0
  %1198 = vmatpush1.msra.mxu0 0.0
  %1199 = vmatprep.subr.mxu0 0.0
  %1200 = vmatpush1.msra.mxu0 0.0
  %1201 = vmatprep.subr.mxu0 0.0
  %1202 = vmatpush1.msra.mxu0 0.0
  %1203 = vmatprep.subr.mxu0 0.0
  %1204 = vmatpush1.msra.mxu0 0.0
  %1205 = vmatprep.subr.mxu0 0.0
  %1206 = vmatpush1.msra.mxu0 0.0
  %1207 = vmatprep.subr.mxu0 0.0
  %1208 = vmatpush1.msra.mxu0 0.0
  %1209 = vmatprep.subr.mxu0 0.0
  %1210 = vmatpush1.msra.mxu0 0.0
  %1211 = vmatprep.subr.mxu0 0.0
  %1212 = vmatpush1.msra.mxu0 0.0
  %1213 = vmatprep.subr.mxu0 0.0
  %1214 = vmatpush1.msra.mxu0 0.0
  %1215 = vmatprep.subr.mxu0 0.0
  %1216 = vmatpush1.msra.mxu0 0.0
  %1217 = vmatprep.subr.mxu0 0.0
  %1218 = vmatpush1.msra.mxu0 0.0
  %1219 = vmatprep.subr.mxu0 0.0
  %1220 = vmatpush1.msra.mxu0 0.0
  %1221 = vmatprep.subr.mxu0 0.0
  %1222 = vmatpush1.msra.mxu0 0.0
  %1223 = vmatprep.subr.mxu0 0.0
  %1224 = vmatpush1.msra.mxu0 0.0
  %1225 = vmatprep.subr.mxu0 0.0
  %1226 = vmatpush1.msra.mxu0 0.0
  %1227 = vmatprep.mubr.f32.mxu0 0.0
  %1228 = vmatmul.mubr.f32.gmra.mrb[0].mxu0 %v1161
  %v1229 = vpop.f32.mrb[0].mxu0
  %v1230 = vadd.f32 0.0, %v1229
  %v1231 = vpop.f32.mrb[0].mxu0
  %1232 = vdwg.mxu0
  %1233 = vrot.lane.b32.xlu0 %v151, 64
  %v1234 = vpop.permute.xlu0 %1233
  %v1237 = vsel %vm158, %v848, 0
  %1239 = vmatprep.subr.mxu0 0.0
  %1240 = vmatpush1.msra.mxu0 %v1234
  %1241 = vmatprep.subr.mxu0 0.0
  %1242 = vmatpush1.msra.mxu0 0.0
  %1243 = vmatprep.subr.mxu0 0.0
  %1244 = vmatpush1.msra.mxu0 0.0
  %1245 = vmatprep.subr.mxu0 0.0
  %1246 = vmatpush1.msra.mxu0 0.0
  %1247 = vmatprep.subr.mxu0 0.0
  %1248 = vmatpush1.msra.mxu0 0.0
  %1249 = vmatprep.subr.mxu0 0.0
  %1250 = vmatpush1.msra.mxu0 0.0
  %1251 = vmatprep.subr.mxu0 0.0
  %1252 = vmatpush1.msra.mxu0 0.0
  %1253 = vmatprep.subr.mxu0 0.0
  %1254 = vmatpush1.msra.mxu0 0.0
  %1255 = vmatprep.subr.mxu0 0.0
  %1256 = vmatpush1.msra.mxu0 0.0
  %1257 = vmatprep.subr.mxu0 0.0
  %1258 = vmatpush1.msra.mxu0 0.0
  %1259 = vmatprep.subr.mxu0 0.0
  %1260 = vmatpush1.msra.mxu0 0.0
  %1261 = vmatprep.subr.mxu0 0.0
  %1262 = vmatpush1.msra.mxu0 0.0
  %1263 = vmatprep.subr.mxu0 0.0
  %1264 = vmatpush1.msra.mxu0 0.0
  %1265 = vmatprep.subr.mxu0 0.0
  %1266 = vmatpush1.msra.mxu0 0.0
  %1267 = vmatprep.subr.mxu0 0.0
  %1268 = vmatpush1.msra.mxu0 0.0
  %1269 = vmatprep.subr.mxu0 0.0
  %1270 = vmatpush1.msra.mxu0 0.0
  %1271 = vmatprep.subr.mxu0 0.0
  %1272 = vmatpush1.msra.mxu0 0.0
  %1273 = vmatprep.subr.mxu0 0.0
  %1274 = vmatpush1.msra.mxu0 0.0
  %1275 = vmatprep.subr.mxu0 0.0
  %1276 = vmatpush1.msra.mxu0 0.0
  %1277 = vmatprep.subr.mxu0 0.0
  %1278 = vmatpush1.msra.mxu0 0.0
  %1279 = vmatprep.subr.mxu0 0.0
  %1280 = vmatpush1.msra.mxu0 0.0
  %1281 = vmatprep.subr.mxu0 0.0
  %1282 = vmatpush1.msra.mxu0 0.0
  %1283 = vmatprep.subr.mxu0 0.0
  %1284 = vmatpush1.msra.mxu0 0.0
  %1285 = vmatprep.subr.mxu0 0.0
  %1286 = vmatpush1.msra.mxu0 0.0
  %1287 = vmatprep.subr.mxu0 0.0
  %1288 = vmatpush1.msra.mxu0 0.0
  %1289 = vmatprep.subr.mxu0 0.0
  %1290 = vmatpush1.msra.mxu0 0.0
  %1291 = vmatprep.subr.mxu0 0.0
  %1292 = vmatpush1.msra.mxu0 0.0
  %1293 = vmatprep.subr.mxu0 0.0
  %1294 = vmatpush1.msra.mxu0 0.0
  %1295 = vmatprep.subr.mxu0 0.0
  %1296 = vmatpush1.msra.mxu0 0.0
  %1297 = vmatprep.subr.mxu0 0.0
  %1298 = vmatpush1.msra.mxu0 0.0
  %1299 = vmatprep.subr.mxu0 0.0
  %1300 = vmatpush1.msra.mxu0 0.0
  %1301 = vmatprep.subr.mxu0 0.0
  %1302 = vmatpush1.msra.mxu0 0.0
  %1303 = vmatprep.mubr.f32.mxu0 0.0
  %1304 = vmatmul.mubr.f32.gmra.mrb[0].mxu0 %v1237
  %v1305 = vpop.f32.mrb[0].mxu0
  %v1306 = vadd.f32 0.0, %v1305
  %v1307 = vpop.f32.mrb[0].mxu0
  %1308 = vdwg.mxu0
  %1309 = vrot.lane.b32.xlu0 %v153, 64
  %v1310 = vpop.permute.xlu0 %1309
  %v1313 = vsel %vm158, %v850, 0
  %1315 = vmatprep.subr.mxu0 0.0
  %1316 = vmatpush1.msra.mxu0 %v1310
  %1317 = vmatprep.subr.mxu0 0.0
  %1318 = vmatpush1.msra.mxu0 0.0
  %1319 = vmatprep.subr.mxu0 0.0
  %1320 = vmatpush1.msra.mxu0 0.0
  %1321 = vmatprep.subr.mxu0 0.0
  %1322 = vmatpush1.msra.mxu0 0.0
  %1323 = vmatprep.subr.mxu0 0.0
  %1324 = vmatpush1.msra.mxu0 0.0
  %1325 = vmatprep.subr.mxu0 0.0
  %1326 = vmatpush1.msra.mxu0 0.0
  %1327 = vmatprep.subr.mxu0 0.0
  %1328 = vmatpush1.msra.mxu0 0.0
  %1329 = vmatprep.subr.mxu0 0.0
  %1330 = vmatpush1.msra.mxu0 0.0
  %1331 = vmatprep.subr.mxu0 0.0
  %1332 = vmatpush1.msra.mxu0 0.0
  %1333 = vmatprep.subr.mxu0 0.0
  %1334 = vmatpush1.msra.mxu0 0.0
  %1335 = vmatprep.subr.mxu0 0.0
  %1336 = vmatpush1.msra.mxu0 0.0
  %1337 = vmatprep.subr.mxu0 0.0
  %1338 = vmatpush1.msra.mxu0 0.0
  %1339 = vmatprep.subr.mxu0 0.0
  %1340 = vmatpush1.msra.mxu0 0.0
  %1341 = vmatprep.subr.mxu0 0.0
  %1342 = vmatpush1.msra.mxu0 0.0
  %1343 = vmatprep.subr.mxu0 0.0
  %1344 = vmatpush1.msra.mxu0 0.0
  %1345 = vmatprep.subr.mxu0 0.0
  %1346 = vmatpush1.msra.mxu0 0.0
  %1347 = vmatprep.subr.mxu0 0.0
  %1348 = vmatpush1.msra.mxu0 0.0
  %1349 = vmatprep.subr.mxu0 0.0
  %1350 = vmatpush1.msra.mxu0 0.0
  %1351 = vmatprep.subr.mxu0 0.0
  %1352 = vmatpush1.msra.mxu0 0.0
  %1353 = vmatprep.subr.mxu0 0.0
  %1354 = vmatpush1.msra.mxu0 0.0
  %1355 = vmatprep.subr.mxu0 0.0
  %1356 = vmatpush1.msra.mxu0 0.0
  %1357 = vmatprep.subr.mxu0 0.0
  %1358 = vmatpush1.msra.mxu0 0.0
  %1359 = vmatprep.subr.mxu0 0.0
  %1360 = vmatpush1.msra.mxu0 0.0
  %1361 = vmatprep.subr.mxu0 0.0
  %1362 = vmatpush1.msra.mxu0 0.0
  %1363 = vmatprep.subr.mxu0 0.0
  %1364 = vmatpush1.msra.mxu0 0.0
  %1365 = vmatprep.subr.mxu0 0.0
  %1366 = vmatpush1.msra.mxu0 0.0
  %1367 = vmatprep.subr.mxu0 0.0
  %1368 = vmatpush1.msra.mxu0 0.0
  %1369 = vmatprep.subr.mxu0 0.0
  %1370 = vmatpush1.msra.mxu0 0.0
  %1371 = vmatprep.subr.mxu0 0.0
  %1372 = vmatpush1.msra.mxu0 0.0
  %1373 = vmatprep.subr.mxu0 0.0
  %1374 = vmatpush1.msra.mxu0 0.0
  %1375 = vmatprep.subr.mxu0 0.0
  %1376 = vmatpush1.msra.mxu0 0.0
  %1377 = vmatprep.subr.mxu0 0.0
  %1378 = vmatpush1.msra.mxu0 0.0
  %1379 = vmatprep.mubr.f32.mxu0 0.0
  %1380 = vmatmul.mubr.f32.gmra.mrb[0].mxu0 %v1313
  %v1381 = vpop.f32.mrb[0].mxu0
  %v1382 = vadd.f32 0.0, %v1381
  %v1383 = vpop.f32.mrb[0].mxu0
  %1384 = vdwg.mxu0
  %1385 = vrot.lane.b32.xlu0 %v155, 64
  %v1386 = vpop.permute.xlu0 %1385
  %v1389 = vsel %vm158, %v852, 0
  %1391 = vmatprep.subr.mxu0 0.0
  %1392 = vmatpush1.msra.mxu0 %v1386
  %1393 = vmatprep.subr.mxu0 0.0
  %1394 = vmatpush1.msra.mxu0 0.0
  %1395 = vmatprep.subr.mxu0 0.0
  %1396 = vmatpush1.msra.mxu0 0.0
  %1397 = vmatprep.subr.mxu0 0.0
  %1398 = vmatpush1.msra.mxu0 0.0
  %1399 = vmatprep.subr.mxu0 0.0
  %1400 = vmatpush1.msra.mxu0 0.0
  %1401 = vmatprep.subr.mxu0 0.0
  %1402 = vmatpush1.msra.mxu0 0.0
  %1403 = vmatprep.subr.mxu0 0.0
  %1404 = vmatpush1.msra.mxu0 0.0
  %1405 = vmatprep.subr.mxu0 0.0
  %1406 = vmatpush1.msra.mxu0 0.0
  %1407 = vmatprep.subr.mxu0 0.0
  %1408 = vmatpush1.msra.mxu0 0.0
  %1409 = vmatprep.subr.mxu0 0.0
  %1410 = vmatpush1.msra.mxu0 0.0
  %1411 = vmatprep.subr.mxu0 0.0
  %1412 = vmatpush1.msra.mxu0 0.0
  %1413 = vmatprep.subr.mxu0 0.0
  %1414 = vmatpush1.msra.mxu0 0.0
  %1415 = vmatprep.subr.mxu0 0.0
  %1416 = vmatpush1.msra.mxu0 0.0
  %1417 = vmatprep.subr.mxu0 0.0
  %1418 = vmatpush1.msra.mxu0 0.0
  %1419 = vmatprep.subr.mxu0 0.0
  %1420 = vmatpush1.msra.mxu0 0.0
  %1421 = vmatprep.subr.mxu0 0.0
  %1422 = vmatpush1.msra.mxu0 0.0
  %1423 = vmatprep.subr.mxu0 0.0
  %1424 = vmatpush1.msra.mxu0 0.0
  %1425 = vmatprep.subr.mxu0 0.0
  %1426 = vmatpush1.msra.mxu0 0.0
  %1427 = vmatprep.subr.mxu0 0.0
  %1428 = vmatpush1.msra.mxu0 0.0
  %1429 = vmatprep.subr.mxu0 0.0
  %1430 = vmatpush1.msra.mxu0 0.0
  %1431 = vmatprep.subr.mxu0 0.0
  %1432 = vmatpush1.msra.mxu0 0.0
  %1433 = vmatprep.subr.mxu0 0.0
  %1434 = vmatpush1.msra.mxu0 0.0
  %1435 = vmatprep.subr.mxu0 0.0
  %1436 = vmatpush1.msra.mxu0 0.0
  %1437 = vmatprep.subr.mxu0 0.0
  %1438 = vmatpush1.msra.mxu0 0.0
  %1439 = vmatprep.subr.mxu0 0.0
  %1440 = vmatpush1.msra.mxu0 0.0
  %1441 = vmatprep.subr.mxu0 0.0
  %1442 = vmatpush1.msra.mxu0 0.0
  %1443 = vmatprep.subr.mxu0 0.0
  %1444 = vmatpush1.msra.mxu0 0.0
  %1445 = vmatprep.subr.mxu0 0.0
  %1446 = vmatpush1.msra.mxu0 0.0
  %1447 = vmatprep.subr.mxu0 0.0
  %1448 = vmatpush1.msra.mxu0 0.0
  %1449 = vmatprep.subr.mxu0 0.0
  %1450 = vmatpush1.msra.mxu0 0.0
  %1451 = vmatprep.subr.mxu0 0.0
  %1452 = vmatpush1.msra.mxu0 0.0
  %1453 = vmatprep.subr.mxu0 0.0
  %1454 = vmatpush1.msra.mxu0 0.0
  %1455 = vmatprep.mubr.f32.mxu0 0.0
  %1456 = vmatmul.mubr.f32.gmra.mrb[0].mxu0 %v1389
  %v1457 = vpop.f32.mrb[0].mxu0
  %v1458 = vadd.f32 0.0, %v1457
  %v1459 = vpop.f32.mrb[0].mxu0
  %1460 = vdwg.mxu0
  %1463 = vrot.lane.b32.xlu0 %v1078, 8
  %v1464 = vpop.permute.xlu0 %1463
  %1465 = vrot.lane.b32.xlu0 %v1154, 8
  %v1466 = vpop.permute.xlu0 %1465
  %1471 = vrot.lane.b32.xlu0 %v1230, 16
  %v1472 = vpop.permute.xlu0 %1471
  %1473 = vrot.lane.b32.xlu0 %v1306, 16
  %v1474 = vpop.permute.xlu0 %1473
  %1479 = vrot.lane.b32.xlu0 %v1382, 24
  %v1480 = vpop.permute.xlu0 %1479
  %1481 = vrot.lane.b32.xlu0 %v1458, 24
  %v1482 = vpop.permute.xlu0 %1481
  %v1485 = vsel %vm158, %v926, %v1464
  %v1486 = vsel %vm158, %v1002, %v1466
  %vm1487 = vcmask 130048
  %v1488 = vsel %vm1487, %v1485, %v1472
  %v1489 = vsel %vm1487, %v1486, %v1474
  %vm1490 = vcmask 195584
  %v1491 = vsel %vm1490, %v1488, %v1480
  %v1492 = vsel %vm1490, %v1489, %v1482
  %1495 = vrot.lane.b32.xlu0 %v382, 8
  %v1496 = vpop.permute.xlu0 %1495
  %1497 = vrot.lane.b32.xlu0 %v458, 8
  %v1498 = vpop.permute.xlu0 %1497
  %1503 = vrot.lane.b32.xlu0 %v534, 16
  %v1504 = vpop.permute.xlu0 %1503
  %1505 = vrot.lane.b32.xlu0 %v610, 16
  %v1506 = vpop.permute.xlu0 %1505
  %1511 = vrot.lane.b32.xlu0 %v686, 24
  %v1512 = vpop.permute.xlu0 %1511
  %1513 = vrot.lane.b32.xlu0 %v762, 24
  %v1514 = vpop.permute.xlu0 %1513
  %v1517 = vsel %vm158, %v230, %v1496
  %v1518 = vsel %vm158, %v306, %v1498
  %v1519 = vsel %vm1487, %v1517, %v1504
  %v1520 = vsel %vm1487, %v1518, %v1506
  %v1521 = vsel %vm1490, %v1519, %v1512
  %v1522 = vsel %vm1490, %v1520, %v1514
  %v1523 = vld [vmem:[%s3 + $0x3] sm:$0x1]
  %v1524 = vld [vmem:[%s3 + $0x4] sm:$0x1]
  %v1525 = vld [vmem:[%s3 + $0x5] sm:$0x1]
  %v1526 = vld [vmem:[%s3 + $0x6] sm:$0x1]
  %v1527 = vadd.f32 %v1491, %v17
  %v1528 = vadd.f32 %v1492, %v18
  %v1529 = vsel %vm30, %v1527, 0.0
  %1530 = vadd.xlane.f32.xlu0 %v1529
  %v1531 = vpop.xlane.xlu0 %1530
  %v1532 = vsel %vm30, %v1528, 0.0
  %1533 = vadd.xlane.f32.xlu0 %v1532
  %v1534 = vpop.xlane.xlu0 %1533
  %v1535 = vrcp.pop 32.0
  %v1536 = vmul.f32 %v1531, %v1535
  %v1537 = vmul.f32 %v1534, %v1535
  %v1538 = vsub.f32 %v1527, %v1536
  %v1539 = vsub.f32 %v1528, %v1537
  %v1540 = vmul.f32 %v1538, %v1538
  %v1541 = vmul.f32 %v1539, %v1539
  %v1542 = vsel %vm30, %v1540, 0.0
  %1543 = vadd.xlane.f32.xlu0 %v1542
  %v1544 = vpop.xlane.xlu0 %1543
  %v1545 = vsel %vm30, %v1541, 0.0
  %1546 = vadd.xlane.f32.xlu0 %v1545
  %v1547 = vpop.xlane.xlu0 %1546
  %v1548 = vmul.f32 %v1544, %v1535
  %v1549 = vmul.f32 %v1547, %v1535
  %v1550 = vadd.f32 %v1548, 1e-12
  %v1551 = vadd.f32 %v1549, 1e-12
  %v1552 = vrsqrt.pop %v1550
  %v1553 = vrsqrt.pop %v1551
  %v1554 = vmul.f32 %v1538, %v1552
  %v1555 = vmul.f32 %v1539, %v1553
  %v1556 = vlaneseq
  %v1557 = vshrl.u32 %v1556, 7
  %v1558 = vsub.s32 0, %v1557
  %v1559 = vrot.slane %v1523, %v1558
  %v1560 = vmul.f32 %v1554, %v1559
  %v1561 = vmul.f32 %v1555, %v1559
  %v1562 = vlaneseq
  %v1563 = vshrl.u32 %v1562, 7
  %v1564 = vsub.s32 0, %v1563
  %v1565 = vrot.slane %v1524, %v1564
  %v1566 = vadd.f32 %v1560, %v1565
  %v1567 = vadd.f32 %v1561, %v1565
  %v1568 = vld [vmem:[%s2] sm:$0xff]
  %v1569 = vld [vmem:[%s2 + $0x8] sm:$0xff]
  %v1570 = vld [vmem:[%s2 + $0x10] sm:$0xff]
  %v1571 = vld [vmem:[%s2 + $0x18] sm:$0xff]
  %v1572 = vld [vmem:[%s3 + $0x1] sm:$0x1]
  %v1573 = vlaneseq
  %v1574 = vshrl.u32 %v1573, 7
  %v1575 = vsub.s32 0, %v1574
  %v1576 = vrot.slane %v1572, %v1575
  %v1578 = vsel %vm30, %v1566, 0
  %v1581 = vsel %vm30, %v1567, 0
  %1583 = vmatprep.subr.mxu0 0.0
  %1584 = vmatpush1.msra.mxu0 %v1568
  %1585 = vmatprep.subr.mxu0 0.0
  %1586 = vmatpush1.msra.mxu0 %v1569
  %1587 = vmatprep.subr.mxu0 0.0
  %1588 = vmatpush1.msra.mxu0 %v1570
  %1589 = vmatprep.subr.mxu0 0.0
  %1590 = vmatpush1.msra.mxu0 %v1571
  %1591 = vmatprep.subr.mxu0 0.0
  %1592 = vmatpush1.msra.mxu0 0.0
  %1593 = vmatprep.subr.mxu0 0.0
  %1594 = vmatpush1.msra.mxu0 0.0
  %1595 = vmatprep.subr.mxu0 0.0
  %1596 = vmatpush1.msra.mxu0 0.0
  %1597 = vmatprep.subr.mxu0 0.0
  %1598 = vmatpush1.msra.mxu0 0.0
  %1599 = vmatprep.subr.mxu0 0.0
  %1600 = vmatpush1.msra.mxu0 0.0
  %1601 = vmatprep.subr.mxu0 0.0
  %1602 = vmatpush1.msra.mxu0 0.0
  %1603 = vmatprep.subr.mxu0 0.0
  %1604 = vmatpush1.msra.mxu0 0.0
  %1605 = vmatprep.subr.mxu0 0.0
  %1606 = vmatpush1.msra.mxu0 0.0
  %1607 = vmatprep.subr.mxu0 0.0
  %1608 = vmatpush1.msra.mxu0 0.0
  %1609 = vmatprep.subr.mxu0 0.0
  %1610 = vmatpush1.msra.mxu0 0.0
  %1611 = vmatprep.subr.mxu0 0.0
  %1612 = vmatpush1.msra.mxu0 0.0
  %1613 = vmatprep.subr.mxu0 0.0
  %1614 = vmatpush1.msra.mxu0 0.0
  %1615 = vmatprep.subr.mxu0 0.0
  %1616 = vmatpush1.msra.mxu0 0.0
  %1617 = vmatprep.subr.mxu0 0.0
  %1618 = vmatpush1.msra.mxu0 0.0
  %1619 = vmatprep.subr.mxu0 0.0
  %1620 = vmatpush1.msra.mxu0 0.0
  %1621 = vmatprep.subr.mxu0 0.0
  %1622 = vmatpush1.msra.mxu0 0.0
  %1623 = vmatprep.subr.mxu0 0.0
  %1624 = vmatpush1.msra.mxu0 0.0
  %1625 = vmatprep.subr.mxu0 0.0
  %1626 = vmatpush1.msra.mxu0 0.0
  %1627 = vmatprep.subr.mxu0 0.0
  %1628 = vmatpush1.msra.mxu0 0.0
  %1629 = vmatprep.subr.mxu0 0.0
  %1630 = vmatpush1.msra.mxu0 0.0
  %1631 = vmatprep.subr.mxu0 0.0
  %1632 = vmatpush1.msra.mxu0 0.0
  %1633 = vmatprep.subr.mxu0 0.0
  %1634 = vmatpush1.msra.mxu0 0.0
  %1635 = vmatprep.subr.mxu0 0.0
  %1636 = vmatpush1.msra.mxu0 0.0
  %1637 = vmatprep.subr.mxu0 0.0
  %1638 = vmatpush1.msra.mxu0 0.0
  %1639 = vmatprep.subr.mxu0 0.0
  %1640 = vmatpush1.msra.mxu0 0.0
  %1641 = vmatprep.subr.mxu0 0.0
  %1642 = vmatpush1.msra.mxu0 0.0
  %1643 = vmatprep.subr.mxu0 0.0
  %1644 = vmatpush1.msra.mxu0 0.0
  %1645 = vmatprep.subr.mxu0 0.0
  %1646 = vmatpush1.msra.mxu0 0.0
  %1647 = vmatprep.mubr.f32.mxu0 0.0
  %1648 = vmatmul.mubr.f32.gmra.mrb[0].mxu0 %v1578
  %v1649 = vpop.f32.mrb[0].mxu0
  %v1650 = vadd.f32 %v1576, %v1649
  %v1651 = vpop.f32.mrb[0].mxu0
  %1652 = vmatprep.mubr.f32.mxu0 0.0
  %1653 = vmatmul.mubr.f32.gmra.mrb[0].mxu0 %v1581
  %v1654 = vpop.f32.mrb[0].mxu0
  %v1655 = vadd.f32 %v1576, %v1654
  %v1656 = vpop.f32.mrb[0].mxu0
  %1657 = vdwg.mxu0
  %v1658 = vmax.f32 %v1650, 0.0
  %v1659 = vmax.f32 %v1655, 0.0
  %v1660 = vld [vmem:[%s2 + $0x20] sm:$0xff]
  %v1661 = vld [vmem:[%s2 + $0x28] sm:$0xff]
  %v1662 = vld [vmem:[%s2 + $0x30] sm:$0xff]
  %v1663 = vld [vmem:[%s2 + $0x38] sm:$0xff]
  %v1664 = vld [vmem:[%s2 + $0x40] sm:$0xff]
  %v1665 = vld [vmem:[%s2 + $0x48] sm:$0xff]
  %v1666 = vld [vmem:[%s2 + $0x50] sm:$0xff]
  %v1667 = vld [vmem:[%s2 + $0x58] sm:$0xff]
  %v1668 = vld [vmem:[%s3 + $0x2] sm:$0x1]
  %v1669 = vlaneseq
  %v1670 = vshrl.u32 %v1669, 7
  %v1671 = vsub.s32 0, %v1670
  %v1672 = vrot.slane %v1668, %v1671
  %vm1673 = vcmask 523264
  %v1675 = vsel %vm1673, %v1658, 0
  %v1678 = vsel %vm1673, %v1659, 0
  %1680 = vmatprep.subr.mxu0 0.0
  %1681 = vmatpush1.msra.mxu0 %v1660
  %1682 = vmatprep.subr.mxu0 0.0
  %1683 = vmatpush1.msra.mxu0 %v1661
  %1684 = vmatprep.subr.mxu0 0.0
  %1685 = vmatpush1.msra.mxu0 %v1662
  %1686 = vmatprep.subr.mxu0 0.0
  %1687 = vmatpush1.msra.mxu0 %v1663
  %1688 = vmatprep.subr.mxu0 0.0
  %1689 = vmatpush1.msra.mxu0 %v1664
  %1690 = vmatprep.subr.mxu0 0.0
  %1691 = vmatpush1.msra.mxu0 %v1665
  %1692 = vmatprep.subr.mxu0 0.0
  %1693 = vmatpush1.msra.mxu0 %v1666
  %1694 = vmatprep.subr.mxu0 0.0
  %1695 = vmatpush1.msra.mxu0 %v1667
  %1696 = vmatprep.subr.mxu0 0.0
  %1697 = vmatpush1.msra.mxu0 0.0
  %1698 = vmatprep.subr.mxu0 0.0
  %1699 = vmatpush1.msra.mxu0 0.0
  %1700 = vmatprep.subr.mxu0 0.0
  %1701 = vmatpush1.msra.mxu0 0.0
  %1702 = vmatprep.subr.mxu0 0.0
  %1703 = vmatpush1.msra.mxu0 0.0
  %1704 = vmatprep.subr.mxu0 0.0
  %1705 = vmatpush1.msra.mxu0 0.0
  %1706 = vmatprep.subr.mxu0 0.0
  %1707 = vmatpush1.msra.mxu0 0.0
  %1708 = vmatprep.subr.mxu0 0.0
  %1709 = vmatpush1.msra.mxu0 0.0
  %1710 = vmatprep.subr.mxu0 0.0
  %1711 = vmatpush1.msra.mxu0 0.0
  %1712 = vmatprep.subr.mxu0 0.0
  %1713 = vmatpush1.msra.mxu0 0.0
  %1714 = vmatprep.subr.mxu0 0.0
  %1715 = vmatpush1.msra.mxu0 0.0
  %1716 = vmatprep.subr.mxu0 0.0
  %1717 = vmatpush1.msra.mxu0 0.0
  %1718 = vmatprep.subr.mxu0 0.0
  %1719 = vmatpush1.msra.mxu0 0.0
  %1720 = vmatprep.subr.mxu0 0.0
  %1721 = vmatpush1.msra.mxu0 0.0
  %1722 = vmatprep.subr.mxu0 0.0
  %1723 = vmatpush1.msra.mxu0 0.0
  %1724 = vmatprep.subr.mxu0 0.0
  %1725 = vmatpush1.msra.mxu0 0.0
  %1726 = vmatprep.subr.mxu0 0.0
  %1727 = vmatpush1.msra.mxu0 0.0
  %1728 = vmatprep.subr.mxu0 0.0
  %1729 = vmatpush1.msra.mxu0 0.0
  %1730 = vmatprep.subr.mxu0 0.0
  %1731 = vmatpush1.msra.mxu0 0.0
  %1732 = vmatprep.subr.mxu0 0.0
  %1733 = vmatpush1.msra.mxu0 0.0
  %1734 = vmatprep.subr.mxu0 0.0
  %1735 = vmatpush1.msra.mxu0 0.0
  %1736 = vmatprep.subr.mxu0 0.0
  %1737 = vmatpush1.msra.mxu0 0.0
  %1738 = vmatprep.subr.mxu0 0.0
  %1739 = vmatpush1.msra.mxu0 0.0
  %1740 = vmatprep.subr.mxu0 0.0
  %1741 = vmatpush1.msra.mxu0 0.0
  %1742 = vmatprep.subr.mxu0 0.0
  %1743 = vmatpush1.msra.mxu0 0.0
  %1744 = vmatprep.mubr.f32.mxu0 0.0
  %1745 = vmatmul.mubr.f32.gmra.mrb[0].mxu0 %v1675
  %v1746 = vpop.f32.mrb[0].mxu0
  %v1747 = vadd.f32 %v1672, %v1746
  %v1748 = vpop.f32.mrb[0].mxu0
  %1749 = vmatprep.mubr.f32.mxu0 0.0
  %1750 = vmatmul.mubr.f32.gmra.mrb[0].mxu0 %v1678
  %v1751 = vpop.f32.mrb[0].mxu0
  %v1752 = vadd.f32 %v1672, %v1751
  %v1753 = vpop.f32.mrb[0].mxu0
  %1754 = vdwg.mxu0
  %v1755 = vadd.f32 %v1747, %v1566
  %v1756 = vadd.f32 %v1752, %v1567
  %v1757 = vsel %vm30, %v1755, 0.0
  %1758 = vadd.xlane.f32.xlu0 %v1757
  %v1759 = vpop.xlane.xlu0 %1758
  %v1760 = vsel %vm30, %v1756, 0.0
  %1761 = vadd.xlane.f32.xlu0 %v1760
  %v1762 = vpop.xlane.xlu0 %1761
  %v1763 = vmul.f32 %v1759, %v1535
  %v1764 = vmul.f32 %v1762, %v1535
  %v1765 = vsub.f32 %v1755, %v1763
  %v1766 = vsub.f32 %v1756, %v1764
  %v1767 = vmul.f32 %v1765, %v1765
  %v1768 = vmul.f32 %v1766, %v1766
  %v1769 = vsel %vm30, %v1767, 0.0
  %1770 = vadd.xlane.f32.xlu0 %v1769
  %v1771 = vpop.xlane.xlu0 %1770
  %v1772 = vsel %vm30, %v1768, 0.0
  %1773 = vadd.xlane.f32.xlu0 %v1772
  %v1774 = vpop.xlane.xlu0 %1773
  %v1775 = vmul.f32 %v1771, %v1535
  %v1776 = vmul.f32 %v1774, %v1535
  %v1777 = vadd.f32 %v1775, 1e-12
  %v1778 = vadd.f32 %v1776, 1e-12
  %v1779 = vrsqrt.pop %v1777
  %v1780 = vrsqrt.pop %v1778
  %v1781 = vmul.f32 %v1765, %v1779
  %v1782 = vmul.f32 %v1766, %v1780
  %v1783 = vlaneseq
  %v1784 = vshrl.u32 %v1783, 7
  %v1785 = vsub.s32 0, %v1784
  %v1786 = vrot.slane %v1525, %v1785
  %v1787 = vmul.f32 %v1781, %v1786
  %v1788 = vmul.f32 %v1782, %v1786
  %v1789 = vlaneseq
  %v1790 = vshrl.u32 %v1789, 7
  %v1791 = vsub.s32 0, %v1790
  %v1792 = vrot.slane %v1526, %v1791
  %v1793 = vadd.f32 %v1787, %v1792
  %v1794 = vadd.f32 %v1788, %v1792
  %1797 = vrot.lane.b32.xlu0 %v1521, 32
  %v1798 = vpop.permute.xlu0 %1797
  %1799 = vrot.lane.b32.xlu0 %v1522, 32
  %v1800 = vpop.permute.xlu0 %1799
  %v1803 = vsel %vm30, %v1793, %v1798
  %v1804 = vsel %vm30, %v1794, %v1800
  %1805 = vst.msk [vmem:[%s4] sm:$0xff] %vm1673, %v1803
  %1806 = vst.msk [vmem:[%s4 + $0x8] sm:$0xff] %vm1673, %v1804
  // Predicated region
  $region18: #{bert_x_attention.1} parent=0 // pred_check
    _
  $region19: #{bert_x_attention.1} parent=0 // pred_check_branch
    %1808 = sbr.rel (0) target = $region21
  $region20: #{bert_x_attention.1} parent=0 // pred_region
    _
  $region21: #{bert_x_attention.1} parent=0 // pred_fallthru
    _
  // Predicated region
  $region22: #{bert_x_attention.1} parent=0 // pred_check
    _
  $region23: #{bert_x_attention.1} parent=0 // pred_check_branch
    %1810 = sbr.rel (0) target = $region25
  $region24: #{bert_x_attention.1} parent=0 // pred_region
    _
  $region25: #{bert_x_attention.1} parent=0 // pred_fallthru
    _

</llo_original>
